<compile_context>
chip_gen: v6e
topology: v6e:2x2x1
jax: 0.10.0
libtpu: 0.0.40
codegen_flags: <defaults>
</compile_context>

<pallas_src>
from functools import partial
from typing import NamedTuple

import jax
import jax.numpy as jnp
from jax.experimental import pallas as pl
from jax.experimental.pallas import tpu as pltpu


def _round_up(x, m):
    return (x + m - 1) // m * m


def _pad2(a, rows, cols, dtype):
    return jnp.pad(a, ((0, rows - a.shape[0]), (0, cols - a.shape[1]))).astype(dtype)


class VAEDims(NamedTuple):
    in_dim: int
    hidden: int
    latent: int
    Dp: int   # padded in_dim (multiple of tile)
    Hp: int   # padded hidden (multiple of 128)
    Lp: int   # padded latent (multiple of 128)
    tk: int   # K tile along in_dim (encoder first layer)
    tn: int   # N tile along in_dim (decoder last layer)


# ----------------------------------------------------------------------------
# Kernels
# ----------------------------------------------------------------------------
def encoder_kernel(x_ref, w1_ref, b1_ref, wmulv_ref, bmulv_ref,
                   dw1_ref, db1_ref, eps_enc_ref, eps_comb_ref,
                   lat_ref, hd_ref, h_acc):
    """K-tiled encoder + reparameterize + decoder first layer.

    grid = (n_k,) over in_dim chunks; h_acc is the f32 accumulator for
    h = x @ W1.  The cheap latent math runs once, on the last K step.
    """
    k = pl.program_id(0)

    @pl.when(k == 0)
    def _():
        h_acc[...] = jnp.zeros_like(h_acc)

    h_acc[...] += jnp.dot(x_ref[...], w1_ref[...],
                          preferred_element_type=jnp.float32)

    @pl.when(k == pl.num_programs(0) - 1)
    def _():
        L = eps_enc_ref.shape[-1]                      # padded latent (mult of 128)
        h = jnp.maximum(h_acc[...] + b1_ref[...], 0.0)  # f32 bias + relu
        h_bf = h.astype(jnp.bfloat16)

        # fused mu|logvar projection: one (B,H) @ (H,2L) matmul, lane split.
        mulv = jnp.dot(h_bf, wmulv_ref[...],
                       preferred_element_type=jnp.float32) + bmulv_ref[...]
        mu = mulv[:, :L]
        lv = mulv[:, L:]
        std = jnp.exp(0.5 * lv)

        z = mu + eps_enc_ref[...] * std                # encoder's own draw
        z_comb = mu + eps_comb_ref[...] * std          # LatentCombiner draw

        # decoder first layer on z_comb (small: (B,L)@(L,H))
        hd = jnp.dot(z_comb.astype(jnp.bfloat16), dw1_ref[...],
                     preferred_element_type=jnp.float32)
        hd = jnp.maximum(hd + db1_ref[...], 0.0)

        lat_ref[:, 0 * L:1 * L] = z
        lat_ref[:, 1 * L:2 * L] = mu
        lat_ref[:, 2 * L:3 * L] = lv
        hd_ref[...] = hd.astype(jnp.bfloat16)


def decoder_kernel(hd_ref, dw2_ref, db2_ref, xrec_ref):
    """N-tiled decoder output: grid = (n_n,) over in_dim chunks."""
    o = jnp.dot(hd_ref[...], dw2_ref[...],
                preferred_element_type=jnp.float32) + db2_ref[...]
    xrec_ref[...] = jax.nn.sigmoid(o)


# ----------------------------------------------------------------------------
# One-time parameter staging (hoisted out of the per-step forward)
# ----------------------------------------------------------------------------
def init_vae_params(key, in_dim, hidden, latent):
    ks = jax.random.split(key, 5)
    s = 0.02
    return dict(
        enc_w1=jax.random.normal(ks[0], (in_dim, hidden), jnp.float32) * s,
        enc_b1=jnp.zeros((1, hidden), jnp.float32),
        enc_wmu=jax.random.normal(ks[1], (hidden, latent), jnp.float32) * s,
        enc_bmu=jnp.zeros((1, latent), jnp.float32),
        enc_wlv=jax.random.normal(ks[2], (hidden, latent), jnp.float32) * s,
        enc_blv=jnp.zeros((1, latent), jnp.float32),
        dec_w1=jax.random.normal(ks[3], (latent, hidden), jnp.float32) * s,
        dec_b1=jnp.zeros((1, hidden), jnp.float32),
        dec_w2=jax.random.normal(ks[4], (hidden, in_dim), jnp.float32) * s,
        dec_b2=jnp.zeros((1, in_dim), jnp.float32),
    )


def prepare_vae_params(p, max_tile=512):
    """Pad to lane-aligned per-modality dims, cast weights to bf16, fuse the
    mu/logvar projection.  Called ONCE; the returned arrays are what the
    kernels stream every step (no per-step re-staging)."""
    in_dim, hidden = p["enc_w1"].shape
    latent = p["enc_wmu"].shape[1]
    Hp = _round_up(hidden, 128)
    Lp = _round_up(latent, 128)
    Dp0 = _round_up(in_dim, 128)
    if Dp0 <= max_tile:
        td, Dp = Dp0, Dp0
    else:
        td = max_tile
        Dp = _round_up(Dp0, td)

    bf, f32 = jnp.bfloat16, jnp.float32
    wmu = _pad2(p["enc_wmu"], Hp, Lp, bf)
    wlv = _pad2(p["enc_wlv"], Hp, Lp, bf)
    bmu = _pad2(p["enc_bmu"], 1, Lp, f32)
    blv = _pad2(p["enc_blv"], 1, Lp, f32)

    weights = dict(
        w1=_pad2(p["enc_w1"], Dp, Hp, bf),
        b1=_pad2(p["enc_b1"], 1, Hp, f32),
        wmulv=jnp.concatenate([wmu, wlv], axis=1),   # (Hp, 2*Lp)
        bmulv=jnp.concatenate([bmu, blv], axis=1),   # (1, 2*Lp)
        dw1=_pad2(p["dec_w1"], Lp, Hp, bf),
        db1=_pad2(p["dec_b1"], 1, Hp, f32),
        dw2=_pad2(p["dec_w2"], Hp, Dp, bf),
        db2=_pad2(p["dec_b2"], 1, Dp, f32),
    )
    dims = VAEDims(in_dim=in_dim, hidden=hidden, latent=latent,
                   Dp=Dp, Hp=Hp, Lp=Lp, tk=td, tn=td)
    return weights, dims


# ----------------------------------------------------------------------------
# Per-modality forward (two pipelined pallas_calls)
# ----------------------------------------------------------------------------
_VMEM_LIMIT = 32 * 1024 * 1024  # safe on v5e/v6e/v7x with <=512-wide bf16 tiles


def _vae_forward_one(x_flat, eps_enc, eps_comb, w, dims):
    B = x_flat.shape[0]
    Bp = _round_up(max(B, 1), 8)

    xp = _pad2(x_flat.astype(jnp.float32), Bp, dims.Dp, jnp.bfloat16)
    epse = _pad2(eps_enc, Bp, dims.Lp, jnp.float32)
    epsc = _pad2(eps_comb, Bp, dims.Lp, jnp.float32)

    Hp, Lp, tk, tn = dims.Hp, dims.Lp, dims.tk, dims.tn
    n_k = dims.Dp // tk
    n_n = dims.Dp // tn

    lat, hd = pl.pallas_call(
        encoder_kernel,
        grid=(n_k,),
        in_specs=[
            pl.BlockSpec((Bp, tk), lambda k: (0, k)),       # x chunk
            pl.BlockSpec((tk, Hp), lambda k: (k, 0)),       # enc_w1 chunk
            pl.BlockSpec((1, Hp), lambda k: (0, 0)),        # enc_b1
            pl.BlockSpec((Hp, 2 * Lp), lambda k: (0, 0)),   # fused wmu|wlv
            pl.BlockSpec((1, 2 * Lp), lambda k: (0, 0)),    # fused bmu|blv
            pl.BlockSpec((Lp, Hp), lambda k: (0, 0)),       # dec_w1
            pl.BlockSpec((1, Hp), lambda k: (0, 0)),        # dec_b1
            pl.BlockSpec((Bp, Lp), lambda k: (0, 0)),       # eps (encoder draw)
            pl.BlockSpec((Bp, Lp), lambda k: (0, 0)),       # eps (combiner draw)
        ],
        out_specs=(pl.BlockSpec((Bp, 3 * Lp), lambda k: (0, 0)),
                   pl.BlockSpec((Bp, Hp), lambda k: (0, 0))),
        out_shape=(jax.ShapeDtypeStruct((Bp, 3 * Lp), jnp.float32),
                   jax.ShapeDtypeStruct((Bp, Hp), jnp.bfloat16)),
        scratch_shapes=[pltpu.VMEM((Bp, Hp), jnp.float32)],
        compiler_params=pltpu.CompilerParams(
            dimension_semantics=("arbitrary",),
            vmem_limit_bytes=_VMEM_LIMIT),
    )(xp, w["w1"], w["b1"], w["wmulv"], w["bmulv"], w["dw1"], w["db1"],
      epse, epsc)

    xrec = pl.pallas_call(
        decoder_kernel,
        grid=(n_n,),
        in_specs=[
            pl.BlockSpec((Bp, Hp), lambda n: (0, 0)),       # decoder hidden
            pl.BlockSpec((Hp, tn), lambda n: (0, n)),       # dec_w2 chunk
            pl.BlockSpec((1, tn), lambda n: (0, n)),        # dec_b2 chunk
        ],
        out_specs=pl.BlockSpec((Bp, tn), lambda n: (0, n)),
        out_shape=jax.ShapeDtypeStruct((Bp, dims.Dp), jnp.float32),
        compiler_params=pltpu.CompilerParams(
            dimension_semantics=("parallel",),
            vmem_limit_bytes=_VMEM_LIMIT),
    )(hd, w["dw2"], w["db2"])

    z = lat[:B, 0 * Lp:0 * Lp + dims.latent]
    mu = lat[:B, 1 * Lp:1 * Lp + dims.latent]
    lv = lat[:B, 2 * Lp:2 * Lp + dims.latent]
    x_recon = xrec[:B, :dims.in_dim]
    return x_recon, z, mu, lv


# ----------------------------------------------------------------------------
# MCVAE_retina forward
# ----------------------------------------------------------------------------
def mcvae_retina_forward(x_oct, x_fundus, wf, wo, rng, *, dims_f, dims_o):
    B = x_oct.shape[0]
    xf = x_fundus.reshape(B, -1)   # torch.flatten semantics
    xo = x_oct.reshape(B, -1)

    # torch.randn_like draws: one per encoder reparameterize, one per
    # LatentCombiner draw (its nn.Linear is unused in forward()).
    k1, k2, k3, k4 = jax.random.split(rng, 4)
    eps_f_enc = jax.random.normal(k1, (B, dims_f.latent), jnp.float32)
    eps_o_enc = jax.random.normal(k2, (B, dims_o.latent), jnp.float32)
    eps_f_comb = jax.random.normal(k3, (B, dims_f.latent), jnp.float32)
    eps_o_comb = jax.random.normal(k4, (B, dims_o.latent), jnp.float32)

    x_recon_f, z_f, mu_f, logvar_f = _vae_forward_one(
        xf, eps_f_enc, eps_f_comb, wf, dims_f)
    x_recon_o, z_o, mu_o, logvar_o = _vae_forward_one(
        xo, eps_o_enc, eps_o_comb, wo, dims_o)

    return (x_recon_f, x_recon_o, z_f, mu_f, logvar_f, z_o, mu_o, logvar_o)


if __name__ == "__main__":
    key = jax.random.PRNGKey(0)
    k_pf, k_po, k_xo, k_xf, k_fwd = jax.random.split(key, 5)

    # Small NCHW retina-style inputs.
    B = 2
    x_fundus = jax.random.uniform(k_xf, (B, 3, 16, 16), jnp.float32)
    x_oct = jax.random.uniform(k_xo, (B, 1, 16, 16), jnp.float32)

    # Latent dims scaled down from (2048, 128) for the synthetic example.
    p_fundus = init_vae_params(k_pf, in_dim=3 * 16 * 16, hidden=128, latent=32)
    p_oct = init_vae_params(k_po, in_dim=1 * 16 * 16, hidden=64, latent=16)

    # One-time weight staging (pad + bf16 cast + mu/logvar fusion), hoisted
    # out of the per-step forward.
    wf, dims_f = prepare_vae_params(p_fundus, max_tile=512)
    wo, dims_o = prepare_vae_params(p_oct, max_tile=512)

    fwd = jax.jit(partial(mcvae_retina_forward, dims_f=dims_f, dims_o=dims_o))
    outs = jax.block_until_ready(fwd(x_oct, x_fundus, wf, wo, k_fwd))

    x_recon_f, x_recon_o, z_f, mu_f, logvar_f, z_o, mu_o, logvar_o = outs
    assert x_recon_f.shape == (B, 3 * 16 * 16)
    assert x_recon_o.shape == (B, 1 * 16 * 16)
    assert z_f.shape == mu_f.shape == logvar_f.shape == (B, 32)
    assert z_o.shape == mu_o.shape == logvar_o.shape == (B, 16)
    assert all(bool(jnp.all(jnp.isfinite(o))) for o in outs)
    assert bool(jnp.all((x_recon_f >= 0) & (x_recon_f <= 1)))
    assert bool(jnp.all((x_recon_o >= 0) & (x_recon_o <= 1)))
    print("KERNEL_OK")
</pallas_src>

<mosaic_0001>
module attributes {stable_mosaic.version = 11 : i64} {
  func.func @encoder_kernel(%arg0: i32, %arg1: memref<8x256xbf16, #tpu.memory_space<vmem>>, %arg2: memref<256x128xbf16, #tpu.memory_space<vmem>>, %arg3: memref<1x128xf32, #tpu.memory_space<vmem>>, %arg4: memref<128x256xbf16, #tpu.memory_space<vmem>>, %arg5: memref<1x256xf32, #tpu.memory_space<vmem>>, %arg6: memref<128x128xbf16, #tpu.memory_space<vmem>>, %arg7: memref<1x128xf32, #tpu.memory_space<vmem>>, %arg8: memref<8x128xf32, #tpu.memory_space<vmem>>, %arg9: memref<8x128xf32, #tpu.memory_space<vmem>>, %arg10: memref<8x384xf32, #tpu.memory_space<vmem>>, %arg11: memref<8x128xbf16, #tpu.memory_space<vmem>>, %arg12: memref<8x128xf32, #tpu.memory_space<vmem>>) attributes {dimension_semantics = [#tpu.dimension_semantics<arbitrary>], iteration_bounds = array<i64: 1>, scalar_prefetch = 0 : i64, scratch_operands = 1 : i64, tpu.core_type = #tpu.core_type<tc>, window_params = [{transform_indices = @transform_0, window_bounds = array<i64: 8, 256>}, {transform_indices = @transform_1, window_bounds = array<i64: 256, 128>}, {pipeline_mode = #tpu.pipeline_mode<synchronous>, transform_indices = @transform_2, window_bounds = array<i64: 1, 128>}, {pipeline_mode = #tpu.pipeline_mode<synchronous>, transform_indices = @transform_3, window_bounds = array<i64: 128, 256>}, {pipeline_mode = #tpu.pipeline_mode<synchronous>, transform_indices = @transform_4, window_bounds = array<i64: 1, 256>}, {pipeline_mode = #tpu.pipeline_mode<synchronous>, transform_indices = @transform_5, window_bounds = array<i64: 128, 128>}, {pipeline_mode = #tpu.pipeline_mode<synchronous>, transform_indices = @transform_6, window_bounds = array<i64: 1, 128>}, {pipeline_mode = #tpu.pipeline_mode<synchronous>, transform_indices = @transform_7, window_bounds = array<i64: 8, 128>}, {pipeline_mode = #tpu.pipeline_mode<synchronous>, transform_indices = @transform_8, window_bounds = array<i64: 8, 128>}, {pipeline_mode = #tpu.pipeline_mode<synchronous>, transform_indices = @transform_9, window_bounds = array<i64: 8, 384>}, {pipeline_mode = #tpu.pipeline_mode<synchronous>, transform_indices = @transform_10, window_bounds = array<i64: 8, 128>}]} {
    %c0_i32 = arith.constant 0 : i32
    %0 = arith.cmpi eq, %arg0, %c0_i32 : i32
    %1 = arith.extui %0 : i1 to i32
    %c0_i32_0 = arith.constant 0 : i32
    %2 = arith.cmpi ne, %1, %c0_i32_0 : i32
    scf.if %2 {
      %cst_10 = arith.constant 0.000000e+00 : f32
      %12 = vector.broadcast %cst_10 : f32 to vector<8x128xf32>
      %c0_11 = arith.constant 0 : index
      %c0_12 = arith.constant 0 : index
      %13 = vector.load %arg12[%c0_11, %c0_12] : memref<8x128xf32, #tpu.memory_space<vmem>>, vector<8x128xf32>
      tpu.vector_store %arg12[%c0_11, %c0_12], %12 {strides = array<i32>} : memref<8x128xf32, #tpu.memory_space<vmem>>, vector<8x128xf32>,
    } else {
    }
    %c0 = arith.constant 0 : index
    %c0_1 = arith.constant 0 : index
    %3 = vector.load %arg12[%c0, %c0_1] : memref<8x128xf32, #tpu.memory_space<vmem>>, vector<8x128xf32>
    %c0_2 = arith.constant 0 : index
    %c0_3 = arith.constant 0 : index
    %4 = vector.load %arg1[%c0_2, %c0_3] : memref<8x256xbf16, #tpu.memory_space<vmem>>, vector<8x256xbf16>
    %c0_4 = arith.constant 0 : index
    %c0_5 = arith.constant 0 : index
    %5 = vector.load %arg2[%c0_4, %c0_5] : memref<256x128xbf16, #tpu.memory_space<vmem>>, vector<256x128xbf16>
    %cst = arith.constant dense<0.000000e+00> : vector<8x128xf32>
    %6 = tpu.matmul %4, %5, %cst {dimension_numbers = #tpu.dot_dimension_numbers<[1], [0], [0], [1], [0, 0, 1, 1], [], []>} : vector<8x256xbf16>, vector<256x128xbf16>, vector<8x128xf32> -> vector<8x128xf32>
    %7 = arith.addf %3, %6 : vector<8x128xf32>
    %c0_6 = arith.constant 0 : index
    %c0_7 = arith.constant 0 : index
    %8 = vector.load %arg12[%c0_6, %c0_7] : memref<8x128xf32, #tpu.memory_space<vmem>>, vector<8x128xf32>
    tpu.vector_store %arg12[%c0_6, %c0_7], %7 {strides = array<i32>} : memref<8x128xf32, #tpu.memory_space<vmem>>, vector<8x128xf32>,
    %c0_i32_8 = arith.constant 0 : i32
    %9 = arith.cmpi eq, %arg0, %c0_i32_8 : i32
    %10 = arith.extui %9 : i1 to i32
    %c0_i32_9 = arith.constant 0 : i32
    %11 = arith.cmpi ne, %10, %c0_i32_9 : i32
    scf.if %11 {
      %c0_10 = arith.constant 0 : index
      %c0_11 = arith.constant 0 : index
      %12 = vector.load %arg12[%c0_10, %c0_11] : memref<8x128xf32, #tpu.memory_space<vmem>>, vector<8x128xf32>
      %c0_12 = arith.constant 0 : index
      %c0_13 = arith.constant 0 : index
      %13 = vector.load %arg3[%c0_12, %c0_13] : memref<1x128xf32, #tpu.memory_space<vmem>>, vector<1x128xf32>
      %14 = vector.broadcast %13 : vector<1x128xf32> to vector<8x128xf32>
      %15 = arith.addf %12, %14 : vector<8x128xf32>
      %cst_14 = arith.constant 0.000000e+00 : f32
      %16 = vector.broadcast %cst_14 : f32 to vector<8x128xf32>
      %17 = arith.maximumf %15, %16 : vector<8x128xf32>
      %18 = arith.truncf %17 : vector<8x128xf32> to vector<8x128xbf16>
      %c0_15 = arith.constant 0 : index
      %c0_16 = arith.constant 0 : index
      %19 = vector.load %arg4[%c0_15, %c0_16] : memref<128x256xbf16, #tpu.memory_space<vmem>>, vector<128x256xbf16>
      %cst_17 = arith.constant dense<0.000000e+00> : vector<8x256xf32>
      %20 = tpu.matmul %18, %19, %cst_17 {dimension_numbers = #tpu.dot_dimension_numbers<[1], [0], [0], [1], [0, 0, 1, 1], [], []>} : vector<8x128xbf16>, vector<128x256xbf16>, vector<8x256xf32> -> vector<8x256xf32>
      %c0_18 = arith.constant 0 : index
      %c0_19 = arith.constant 0 : index
      %21 = vector.load %arg5[%c0_18, %c0_19] : memref<1x256xf32, #tpu.memory_space<vmem>>, vector<1x256xf32>
      %22 = vector.broadcast %21 : vector<1x256xf32> to vector<8x256xf32>
      %23 = arith.addf %20, %22 : vector<8x256xf32>
      %24 = vector.extract_strided_slice %23 {offsets = [0, 0], sizes = [8, 128], strides = [1, 1]} : vector<8x256xf32> to vector<8x128xf32>
      %25 = vector.extract_strided_slice %23 {offsets = [0, 128], sizes = [8, 128], strides = [1, 1]} : vector<8x256xf32> to vector<8x128xf32>
      %cst_20 = arith.constant 5.000000e-01 : f32
      %26 = vector.broadcast %cst_20 : f32 to vector<8x128xf32>
      %27 = arith.mulf %26, %25 : vector<8x128xf32>
      %28 = math.exp %27 : vector<8x128xf32>
      %c0_21 = arith.constant 0 : index
      %c0_22 = arith.constant 0 : index
      %29 = vector.load %arg8[%c0_21, %c0_22] : memref<8x128xf32, #tpu.memory_space<vmem>>, vector<8x128xf32>
      %30 = arith.mulf %29, %28 : vector<8x128xf32>
      %31 = arith.addf %24, %30 : vector<8x128xf32>
      %c0_23 = arith.constant 0 : index
      %c0_24 = arith.constant 0 : index
      %32 = vector.load %arg9[%c0_23, %c0_24] : memref<8x128xf32, #tpu.memory_space<vmem>>, vector<8x128xf32>
      %33 = arith.mulf %32, %28 : vector<8x128xf32>
      %34 = arith.addf %24, %33 : vector<8x128xf32>
      %35 = arith.truncf %34 : vector<8x128xf32> to vector<8x128xbf16>
      %c0_25 = arith.constant 0 : index
      %c0_26 = arith.constant 0 : index
      %36 = vector.load %arg6[%c0_25, %c0_26] : memref<128x128xbf16, #tpu.memory_space<vmem>>, vector<128x128xbf16>
      %cst_27 = arith.constant dense<0.000000e+00> : vector<8x128xf32>
      %37 = tpu.matmul %35, %36, %cst_27 {dimension_numbers = #tpu.dot_dimension_numbers<[1], [0], [0], [1], [0, 0, 1, 1], [], []>} : vector<8x128xbf16>, vector<128x128xbf16>, vector<8x128xf32> -> vector<8x128xf32>
      %c0_28 = arith.constant 0 : index
      %c0_29 = arith.constant 0 : index
      %38 = vector.load %arg7[%c0_28, %c0_29] : memref<1x128xf32, #tpu.memory_space<vmem>>, vector<1x128xf32>
      %39 = vector.broadcast %38 : vector<1x128xf32> to vector<8x128xf32>
      %40 = arith.addf %37, %39 : vector<8x128xf32>
      %cst_30 = arith.constant 0.000000e+00 : f32
      %41 = vector.broadcast %cst_30 : f32 to vector<8x128xf32>
      %42 = arith.maximumf %40, %41 : vector<8x128xf32>
      %c0_31 = arith.constant 0 : index
      %c0_32 = arith.constant 0 : index
      %43 = vector.load %arg10[%c0_31, %c0_32] : memref<8x384xf32, #tpu.memory_space<vmem>>, vector<8x128xf32>
      tpu.vector_store %arg10[%c0_31, %c0_32], %31 {strides = array<i32>} : memref<8x384xf32, #tpu.memory_space<vmem>>, vector<8x128xf32>,
      %c0_33 = arith.constant 0 : index
      %c128 = arith.constant 128 : index
      %44 = vector.load %arg10[%c0_33, %c128] : memref<8x384xf32, #tpu.memory_space<vmem>>, vector<8x128xf32>
      tpu.vector_store %arg10[%c0_33, %c128], %24 {strides = array<i32>} : memref<8x384xf32, #tpu.memory_space<vmem>>, vector<8x128xf32>,
      %c0_34 = arith.constant 0 : index
      %c256 = arith.constant 256 : index
      %45 = vector.load %arg10[%c0_34, %c256] : memref<8x384xf32, #tpu.memory_space<vmem>>, vector<8x128xf32>
      tpu.vector_store %arg10[%c0_34, %c256], %25 {strides = array<i32>} : memref<8x384xf32, #tpu.memory_space<vmem>>, vector<8x128xf32>,
      %46 = arith.truncf %42 : vector<8x128xf32> to vector<8x128xbf16>
      %c0_35 = arith.constant 0 : index
      %c0_36 = arith.constant 0 : index
      %47 = vector.load %arg11[%c0_35, %c0_36] : memref<8x128xbf16, #tpu.memory_space<vmem>>, vector<8x128xbf16>
      tpu.vector_store %arg11[%c0_35, %c0_36], %46 {strides = array<i32>} : memref<8x128xbf16, #tpu.memory_space<vmem>>, vector<8x128xbf16>,
    } else {
    }
    return
  }
  func.func @transform_0(%arg0: i32) -> (i32, i32) {
    %c0_i32 = arith.constant 0 : i32
    %c0_i32_0 = arith.constant 0 : i32
    return %c0_i32, %arg0 : i32, i32
  }
  func.func @transform_1(%arg0: i32) -> (i32, i32) {
    %c0_i32 = arith.constant 0 : i32
    %c0_i32_0 = arith.constant 0 : i32
    return %arg0, %c0_i32 : i32, i32
  }
  func.func @transform_2(%arg0: i32) -> (i32, i32) {
    %c0_i32 = arith.constant 0 : i32
    %c0_i32_0 = arith.constant 0 : i32
    %c0_i32_1 = arith.constant 0 : i32
    return %c0_i32, %c0_i32_0 : i32, i32
  }
  func.func @transform_3(%arg0: i32) -> (i32, i32) {
    %c0_i32 = arith.constant 0 : i32
    %c0_i32_0 = arith.constant 0 : i32
    %c0_i32_1 = arith.constant 0 : i32
    return %c0_i32, %c0_i32_0 : i32, i32
  }
  func.func @transform_4(%arg0: i32) -> (i32, i32) {
    %c0_i32 = arith.constant 0 : i32
    %c0_i32_0 = arith.constant 0 : i32
    %c0_i32_1 = arith.constant 0 : i32
    return %c0_i32, %c0_i32_0 : i32, i32
  }
  func.func @transform_5(%arg0: i32) -> (i32, i32) {
    %c0_i32 = arith.constant 0 : i32
    %c0_i32_0 = arith.constant 0 : i32
    %c0_i32_1 = arith.constant 0 : i32
    return %c0_i32, %c0_i32_0 : i32, i32
  }
  func.func @transform_6(%arg0: i32) -> (i32, i32) {
    %c0_i32 = arith.constant 0 : i32
    %c0_i32_0 = arith.constant 0 : i32
    %c0_i32_1 = arith.constant 0 : i32
    return %c0_i32, %c0_i32_0 : i32, i32
  }
  func.func @transform_7(%arg0: i32) -> (i32, i32) {
    %c0_i32 = arith.constant 0 : i32
    %c0_i32_0 = arith.constant 0 : i32
    %c0_i32_1 = arith.constant 0 : i32
    return %c0_i32, %c0_i32_0 : i32, i32
  }
  func.func @transform_8(%arg0: i32) -> (i32, i32) {
    %c0_i32 = arith.constant 0 : i32
    %c0_i32_0 = arith.constant 0 : i32
    %c0_i32_1 = arith.constant 0 : i32
    return %c0_i32, %c0_i32_0 : i32, i32
  }
  func.func @transform_9(%arg0: i32) -> (i32, i32) {
    %c0_i32 = arith.constant 0 : i32
    %c0_i32_0 = arith.constant 0 : i32
    %c0_i32_1 = arith.constant 0 : i32
    return %c0_i32, %c0_i32_0 : i32, i32
  }
  func.func @transform_10(%arg0: i32) -> (i32, i32) {
    %c0_i32 = arith.constant 0 : i32
    %c0_i32_0 = arith.constant 0 : i32
    %c0_i32_1 = arith.constant 0 : i32
    return %c0_i32, %c0_i32_0 : i32, i32
  }
}

module attributes {stable_mosaic.version = 11 : i64} {
  func.func @decoder_kernel(%arg0: i32, %arg1: memref<8x128xbf16, #tpu.memory_space<vmem>>, %arg2: memref<128x256xbf16, #tpu.memory_space<vmem>>, %arg3: memref<1x256xf32, #tpu.memory_space<vmem>>, %arg4: memref<8x256xf32, #tpu.memory_space<vmem>>) attributes {dimension_semantics = [#tpu.dimension_semantics<parallel>], iteration_bounds = array<i64: 1>, scalar_prefetch = 0 : i64, scratch_operands = 0 : i64, tpu.core_type = #tpu.core_type<tc>, window_params = [{pipeline_mode = #tpu.pipeline_mode<synchronous>, transform_indices = @transform_0, window_bounds = array<i64: 8, 128>}, {transform_indices = @transform_1, window_bounds = array<i64: 128, 256>}, {transform_indices = @transform_2, window_bounds = array<i64: 1, 256>}, {transform_indices = @transform_3, window_bounds = array<i64: 8, 256>}]} {
    %c0 = arith.constant 0 : index
    %c0_0 = arith.constant 0 : index
    %0 = vector.load %arg1[%c0, %c0_0] : memref<8x128xbf16, #tpu.memory_space<vmem>>, vector<8x128xbf16>
    %c0_1 = arith.constant 0 : index
    %c0_2 = arith.constant 0 : index
    %1 = vector.load %arg2[%c0_1, %c0_2] : memref<128x256xbf16, #tpu.memory_space<vmem>>, vector<128x256xbf16>
    %cst = arith.constant dense<0.000000e+00> : vector<8x256xf32>
    %2 = tpu.matmul %0, %1, %cst {dimension_numbers = #tpu.dot_dimension_numbers<[1], [0], [0], [1], [0, 0, 1, 1], [], []>} : vector<8x128xbf16>, vector<128x256xbf16>, vector<8x256xf32> -> vector<8x256xf32>
    %c0_3 = arith.constant 0 : index
    %c0_4 = arith.constant 0 : index
    %3 = vector.load %arg3[%c0_3, %c0_4] : memref<1x256xf32, #tpu.memory_space<vmem>>, vector<1x256xf32>
    %4 = vector.broadcast %3 : vector<1x256xf32> to vector<8x256xf32>
    %5 = arith.addf %2, %4 : vector<8x256xf32>
    %6 = arith.negf %5 : vector<8x256xf32>
    %7 = math.exp %6 : vector<8x256xf32>
    %cst_5 = arith.constant 1.000000e+00 : f32
    %8 = vector.broadcast %cst_5 : f32 to vector<8x256xf32>
    %9 = arith.addf %8, %7 : vector<8x256xf32>
    %10 = arith.divf %8, %9 : vector<8x256xf32>
    %c0_6 = arith.constant 0 : index
    %c0_7 = arith.constant 0 : index
    %11 = vector.load %arg4[%c0_6, %c0_7] : memref<8x256xf32, #tpu.memory_space<vmem>>, vector<8x256xf32>
    tpu.vector_store %arg4[%c0_6, %c0_7], %10 {strides = array<i32>} : memref<8x256xf32, #tpu.memory_space<vmem>>, vector<8x256xf32>,
    return
  }
  func.func @transform_0(%arg0: i32) -> (i32, i32) {
    %c0_i32 = arith.constant 0 : i32
    %c0_i32_0 = arith.constant 0 : i32
    %c0_i32_1 = arith.constant 0 : i32
    return %c0_i32, %c0_i32_0 : i32, i32
  }
  func.func @transform_1(%arg0: i32) -> (i32, i32) {
    %c0_i32 = arith.constant 0 : i32
    %c0_i32_0 = arith.constant 0 : i32
    return %c0_i32, %arg0 : i32, i32
  }
  func.func @transform_2(%arg0: i32) -> (i32, i32) {
    %c0_i32 = arith.constant 0 : i32
    %c0_i32_0 = arith.constant 0 : i32
    return %c0_i32, %arg0 : i32, i32
  }
  func.func @transform_3(%arg0: i32) -> (i32, i32) {
    %c0_i32 = arith.constant 0 : i32
    %c0_i32_0 = arith.constant 0 : i32
    return %c0_i32, %arg0 : i32, i32
  }
}

module attributes {stable_mosaic.version = 11 : i64} {
  func.func @encoder_kernel(%arg0: i32, %arg1: memref<8x512xbf16, #tpu.memory_space<vmem>>, %arg2: memref<512x128xbf16, #tpu.memory_space<vmem>>, %arg3: memref<1x128xf32, #tpu.memory_space<vmem>>, %arg4: memref<128x256xbf16, #tpu.memory_space<vmem>>, %arg5: memref<1x256xf32, #tpu.memory_space<vmem>>, %arg6: memref<128x128xbf16, #tpu.memory_space<vmem>>, %arg7: memref<1x128xf32, #tpu.memory_space<vmem>>, %arg8: memref<8x128xf32, #tpu.memory_space<vmem>>, %arg9: memref<8x128xf32, #tpu.memory_space<vmem>>, %arg10: memref<8x384xf32, #tpu.memory_space<vmem>>, %arg11: memref<8x128xbf16, #tpu.memory_space<vmem>>, %arg12: memref<8x128xf32, #tpu.memory_space<vmem>>) attributes {dimension_semantics = [#tpu.dimension_semantics<arbitrary>], iteration_bounds = array<i64: 2>, scalar_prefetch = 0 : i64, scratch_operands = 1 : i64, tpu.core_type = #tpu.core_type<tc>, window_params = [{transform_indices = @transform_0, window_bounds = array<i64: 8, 512>}, {transform_indices = @transform_1, window_bounds = array<i64: 512, 128>}, {pipeline_mode = #tpu.pipeline_mode<synchronous>, transform_indices = @transform_2, window_bounds = array<i64: 1, 128>}, {pipeline_mode = #tpu.pipeline_mode<synchronous>, transform_indices = @transform_3, window_bounds = array<i64: 128, 256>}, {pipeline_mode = #tpu.pipeline_mode<synchronous>, transform_indices = @transform_4, window_bounds = array<i64: 1, 256>}, {pipeline_mode = #tpu.pipeline_mode<synchronous>, transform_indices = @transform_5, window_bounds = array<i64: 128, 128>}, {pipeline_mode = #tpu.pipeline_mode<synchronous>, transform_indices = @transform_6, window_bounds = array<i64: 1, 128>}, {pipeline_mode = #tpu.pipeline_mode<synchronous>, transform_indices = @transform_7, window_bounds = array<i64: 8, 128>}, {pipeline_mode = #tpu.pipeline_mode<synchronous>, transform_indices = @transform_8, window_bounds = array<i64: 8, 128>}, {pipeline_mode = #tpu.pipeline_mode<synchronous>, transform_indices = @transform_9, window_bounds = array<i64: 8, 384>}, {pipeline_mode = #tpu.pipeline_mode<synchronous>, transform_indices = @transform_10, window_bounds = array<i64: 8, 128>}]} {
    %c0_i32 = arith.constant 0 : i32
    %0 = arith.cmpi eq, %arg0, %c0_i32 : i32
    %1 = arith.extui %0 : i1 to i32
    %c0_i32_0 = arith.constant 0 : i32
    %2 = arith.cmpi ne, %1, %c0_i32_0 : i32
    scf.if %2 {
      %cst_9 = arith.constant 0.000000e+00 : f32
      %12 = vector.broadcast %cst_9 : f32 to vector<8x128xf32>
      %c0_10 = arith.constant 0 : index
      %c0_11 = arith.constant 0 : index
      %13 = vector.load %arg12[%c0_10, %c0_11] : memref<8x128xf32, #tpu.memory_space<vmem>>, vector<8x128xf32>
      tpu.vector_store %arg12[%c0_10, %c0_11], %12 {strides = array<i32>} : memref<8x128xf32, #tpu.memory_space<vmem>>, vector<8x128xf32>,
    } else {
    }
    %c0 = arith.constant 0 : index
    %c0_1 = arith.constant 0 : index
    %3 = vector.load %arg12[%c0, %c0_1] : memref<8x128xf32, #tpu.memory_space<vmem>>, vector<8x128xf32>
    %c0_2 = arith.constant 0 : index
    %c0_3 = arith.constant 0 : index
    %4 = vector.load %arg1[%c0_2, %c0_3] : memref<8x512xbf16, #tpu.memory_space<vmem>>, vector<8x512xbf16>
    %c0_4 = arith.constant 0 : index
    %c0_5 = arith.constant 0 : index
    %5 = vector.load %arg2[%c0_4, %c0_5] : memref<512x128xbf16, #tpu.memory_space<vmem>>, vector<512x128xbf16>
    %cst = arith.constant dense<0.000000e+00> : vector<8x128xf32>
    %6 = tpu.matmul %4, %5, %cst {dimension_numbers = #tpu.dot_dimension_numbers<[1], [0], [0], [1], [0, 0, 1, 1], [], []>} : vector<8x512xbf16>, vector<512x128xbf16>, vector<8x128xf32> -> vector<8x128xf32>
    %7 = arith.addf %3, %6 : vector<8x128xf32>
    %c0_6 = arith.constant 0 : index
    %c0_7 = arith.constant 0 : index
    %8 = vector.load %arg12[%c0_6, %c0_7] : memref<8x128xf32, #tpu.memory_space<vmem>>, vector<8x128xf32>
    tpu.vector_store %arg12[%c0_6, %c0_7], %7 {strides = array<i32>} : memref<8x128xf32, #tpu.memory_space<vmem>>, vector<8x128xf32>,
    %c1_i32 = arith.constant 1 : i32
    %9 = arith.cmpi eq, %arg0, %c1_i32 : i32
    %10 = arith.extui %9 : i1 to i32
    %c0_i32_8 = arith.constant 0 : i32
    %11 = arith.cmpi ne, %10, %c0_i32_8 : i32
    scf.if %11 {
      %c0_9 = arith.constant 0 : index
      %c0_10 = arith.constant 0 : index
      %12 = vector.load %arg12[%c0_9, %c0_10] : memref<8x128xf32, #tpu.memory_space<vmem>>, vector<8x128xf32>
      %c0_11 = arith.constant 0 : index
      %c0_12 = arith.constant 0 : index
      %13 = vector.load %arg3[%c0_11, %c0_12] : memref<1x128xf32, #tpu.memory_space<vmem>>, vector<1x128xf32>
      %14 = vector.broadcast %13 : vector<1x128xf32> to vector<8x128xf32>
      %15 = arith.addf %12, %14 : vector<8x128xf32>
      %cst_13 = arith.constant 0.000000e+00 : f32
      %16 = vector.broadcast %cst_13 : f32 to vector<8x128xf32>
      %17 = arith.maximumf %15, %16 : vector<8x128xf32>
      %18 = arith.truncf %17 : vector<8x128xf32> to vector<8x128xbf16>
      %c0_14 = arith.constant 0 : index
      %c0_15 = arith.constant 0 : index
      %19 = vector.load %arg4[%c0_14, %c0_15] : memref<128x256xbf16, #tpu.memory_space<vmem>>, vector<128x256xbf16>
      %cst_16 = arith.constant dense<0.000000e+00> : vector<8x256xf32>
      %20 = tpu.matmul %18, %19, %cst_16 {dimension_numbers = #tpu.dot_dimension_numbers<[1], [0], [0], [1], [0, 0, 1, 1], [], []>} : vector<8x128xbf16>, vector<128x256xbf16>, vector<8x256xf32> -> vector<8x256xf32>
      %c0_17 = arith.constant 0 : index
      %c0_18 = arith.constant 0 : index
      %21 = vector.load %arg5[%c0_17, %c0_18] : memref<1x256xf32, #tpu.memory_space<vmem>>, vector<1x256xf32>
      %22 = vector.broadcast %21 : vector<1x256xf32> to vector<8x256xf32>
      %23 = arith.addf %20, %22 : vector<8x256xf32>
      %24 = vector.extract_strided_slice %23 {offsets = [0, 0], sizes = [8, 128], strides = [1, 1]} : vector<8x256xf32> to vector<8x128xf32>
      %25 = vector.extract_strided_slice %23 {offsets = [0, 128], sizes = [8, 128], strides = [1, 1]} : vector<8x256xf32> to vector<8x128xf32>
      %cst_19 = arith.constant 5.000000e-01 : f32
      %26 = vector.broadcast %cst_19 : f32 to vector<8x128xf32>
      %27 = arith.mulf %26, %25 : vector<8x128xf32>
      %28 = math.exp %27 : vector<8x128xf32>
      %c0_20 = arith.constant 0 : index
      %c0_21 = arith.constant 0 : index
      %29 = vector.load %arg8[%c0_20, %c0_21] : memref<8x128xf32, #tpu.memory_space<vmem>>, vector<8x128xf32>
      %30 = arith.mulf %29, %28 : vector<8x128xf32>
      %31 = arith.addf %24, %30 : vector<8x128xf32>
      %c0_22 = arith.constant 0 : index
      %c0_23 = arith.constant 0 : index
      %32 = vector.load %arg9[%c0_22, %c0_23] : memref<8x128xf32, #tpu.memory_space<vmem>>, vector<8x128xf32>
      %33 = arith.mulf %32, %28 : vector<8x128xf32>
      %34 = arith.addf %24, %33 : vector<8x128xf32>
      %35 = arith.truncf %34 : vector<8x128xf32> to vector<8x128xbf16>
      %c0_24 = arith.constant 0 : index
      %c0_25 = arith.constant 0 : index
      %36 = vector.load %arg6[%c0_24, %c0_25] : memref<128x128xbf16, #tpu.memory_space<vmem>>, vector<128x128xbf16>
      %cst_26 = arith.constant dense<0.000000e+00> : vector<8x128xf32>
      %37 = tpu.matmul %35, %36, %cst_26 {dimension_numbers = #tpu.dot_dimension_numbers<[1], [0], [0], [1], [0, 0, 1, 1], [], []>} : vector<8x128xbf16>, vector<128x128xbf16>, vector<8x128xf32> -> vector<8x128xf32>
      %c0_27 = arith.constant 0 : index
      %c0_28 = arith.constant 0 : index
      %38 = vector.load %arg7[%c0_27, %c0_28] : memref<1x128xf32, #tpu.memory_space<vmem>>, vector<1x128xf32>
      %39 = vector.broadcast %38 : vector<1x128xf32> to vector<8x128xf32>
      %40 = arith.addf %37, %39 : vector<8x128xf32>
      %cst_29 = arith.constant 0.000000e+00 : f32
      %41 = vector.broadcast %cst_29 : f32 to vector<8x128xf32>
      %42 = arith.maximumf %40, %41 : vector<8x128xf32>
      %c0_30 = arith.constant 0 : index
      %c0_31 = arith.constant 0 : index
      %43 = vector.load %arg10[%c0_30, %c0_31] : memref<8x384xf32, #tpu.memory_space<vmem>>, vector<8x128xf32>
      tpu.vector_store %arg10[%c0_30, %c0_31], %31 {strides = array<i32>} : memref<8x384xf32, #tpu.memory_space<vmem>>, vector<8x128xf32>,
      %c0_32 = arith.constant 0 : index
      %c128 = arith.constant 128 : index
      %44 = vector.load %arg10[%c0_32, %c128] : memref<8x384xf32, #tpu.memory_space<vmem>>, vector<8x128xf32>
      tpu.vector_store %arg10[%c0_32, %c128], %24 {strides = array<i32>} : memref<8x384xf32, #tpu.memory_space<vmem>>, vector<8x128xf32>,
      %c0_33 = arith.constant 0 : index
      %c256 = arith.constant 256 : index
      %45 = vector.load %arg10[%c0_33, %c256] : memref<8x384xf32, #tpu.memory_space<vmem>>, vector<8x128xf32>
      tpu.vector_store %arg10[%c0_33, %c256], %25 {strides = array<i32>} : memref<8x384xf32, #tpu.memory_space<vmem>>, vector<8x128xf32>,
      %46 = arith.truncf %42 : vector<8x128xf32> to vector<8x128xbf16>
      %c0_34 = arith.constant 0 : index
      %c0_35 = arith.constant 0 : index
      %47 = vector.load %arg11[%c0_34, %c0_35] : memref<8x128xbf16, #tpu.memory_space<vmem>>, vector<8x128xbf16>
      tpu.vector_store %arg11[%c0_34, %c0_35], %46 {strides = array<i32>} : memref<8x128xbf16, #tpu.memory_space<vmem>>, vector<8x128xbf16>,
    } else {
    }
    return
  }
  func.func @transform_0(%arg0: i32) -> (i32, i32) {
    %c0_i32 = arith.constant 0 : i32
    %c0_i32_0 = arith.constant 0 : i32
    return %c0_i32, %arg0 : i32, i32
  }
  func.func @transform_1(%arg0: i32) -> (i32, i32) {
    %c0_i32 = arith.constant 0 : i32
    %c0_i32_0 = arith.constant 0 : i32
    return %arg0, %c0_i32 : i32, i32
  }
  func.func @transform_2(%arg0: i32) -> (i32, i32) {
    %c0_i32 = arith.constant 0 : i32
    %c0_i32_0 = arith.constant 0 : i32
    %c0_i32_1 = arith.constant 0 : i32
    return %c0_i32, %c0_i32_0 : i32, i32
  }
  func.func @transform_3(%arg0: i32) -> (i32, i32) {
    %c0_i32 = arith.constant 0 : i32
    %c0_i32_0 = arith.constant 0 : i32
    %c0_i32_1 = arith.constant 0 : i32
    return %c0_i32, %c0_i32_0 : i32, i32
  }
  func.func @transform_4(%arg0: i32) -> (i32, i32) {
    %c0_i32 = arith.constant 0 : i32
    %c0_i32_0 = arith.constant 0 : i32
    %c0_i32_1 = arith.constant 0 : i32
    return %c0_i32, %c0_i32_0 : i32, i32
  }
  func.func @transform_5(%arg0: i32) -> (i32, i32) {
    %c0_i32 = arith.constant 0 : i32
    %c0_i32_0 = arith.constant 0 : i32
    %c0_i32_1 = arith.constant 0 : i32
    return %c0_i32, %c0_i32_0 : i32, i32
  }
  func.func @transform_6(%arg0: i32) -> (i32, i32) {
    %c0_i32 = arith.constant 0 : i32
    %c0_i32_0 = arith.constant 0 : i32
    %c0_i32_1 = arith.constant 0 : i32
    return %c0_i32, %c0_i32_0 : i32, i32
  }
  func.func @transform_7(%arg0: i32) -> (i32, i32) {
    %c0_i32 = arith.constant 0 : i32
    %c0_i32_0 = arith.constant 0 : i32
    %c0_i32_1 = arith.constant 0 : i32
    return %c0_i32, %c0_i32_0 : i32, i32
  }
  func.func @transform_8(%arg0: i32) -> (i32, i32) {
    %c0_i32 = arith.constant 0 : i32
    %c0_i32_0 = arith.constant 0 : i32
    %c0_i32_1 = arith.constant 0 : i32
    return %c0_i32, %c0_i32_0 : i32, i32
  }
  func.func @transform_9(%arg0: i32) -> (i32, i32) {
    %c0_i32 = arith.constant 0 : i32
    %c0_i32_0 = arith.constant 0 : i32
    %c0_i32_1 = arith.constant 0 : i32
    return %c0_i32, %c0_i32_0 : i32, i32
  }
  func.func @transform_10(%arg0: i32) -> (i32, i32) {
    %c0_i32 = arith.constant 0 : i32
    %c0_i32_0 = arith.constant 0 : i32
    %c0_i32_1 = arith.constant 0 : i32
    return %c0_i32, %c0_i32_0 : i32, i32
  }
}

module attributes {stable_mosaic.version = 11 : i64} {
  func.func @decoder_kernel(%arg0: i32, %arg1: memref<8x128xbf16, #tpu.memory_space<vmem>>, %arg2: memref<128x512xbf16, #tpu.memory_space<vmem>>, %arg3: memref<1x512xf32, #tpu.memory_space<vmem>>, %arg4: memref<8x512xf32, #tpu.memory_space<vmem>>) attributes {dimension_semantics = [#tpu.dimension_semantics<parallel>], iteration_bounds = array<i64: 2>, scalar_prefetch = 0 : i64, scratch_operands = 0 : i64, tpu.core_type = #tpu.core_type<tc>, window_params = [{pipeline_mode = #tpu.pipeline_mode<synchronous>, transform_indices = @transform_0, window_bounds = array<i64: 8, 128>}, {transform_indices = @transform_1, window_bounds = array<i64: 128, 512>}, {transform_indices = @transform_2, window_bounds = array<i64: 1, 512>}, {transform_indices = @transform_3, window_bounds = array<i64: 8, 512>}]} {
    %c0 = arith.constant 0 : index
    %c0_0 = arith.constant 0 : index
    %0 = vector.load %arg1[%c0, %c0_0] : memref<8x128xbf16, #tpu.memory_space<vmem>>, vector<8x128xbf16>
    %c0_1 = arith.constant 0 : index
    %c0_2 = arith.constant 0 : index
    %1 = vector.load %arg2[%c0_1, %c0_2] : memref<128x512xbf16, #tpu.memory_space<vmem>>, vector<128x512xbf16>
    %cst = arith.constant dense<0.000000e+00> : vector<8x512xf32>
    %2 = tpu.matmul %0, %1, %cst {dimension_numbers = #tpu.dot_dimension_numbers<[1], [0], [0], [1], [0, 0, 1, 1], [], []>} : vector<8x128xbf16>, vector<128x512xbf16>, vector<8x512xf32> -> vector<8x512xf32>
    %c0_3 = arith.constant 0 : index
    %c0_4 = arith.constant 0 : index
    %3 = vector.load %arg3[%c0_3, %c0_4] : memref<1x512xf32, #tpu.memory_space<vmem>>, vector<1x512xf32>
    %4 = vector.broadcast %3 : vector<1x512xf32> to vector<8x512xf32>
    %5 = arith.addf %2, %4 : vector<8x512xf32>
    %6 = arith.negf %5 : vector<8x512xf32>
    %7 = math.exp %6 : vector<8x512xf32>
    %cst_5 = arith.constant 1.000000e+00 : f32
    %8 = vector.broadcast %cst_5 : f32 to vector<8x512xf32>
    %9 = arith.addf %8, %7 : vector<8x512xf32>
    %10 = arith.divf %8, %9 : vector<8x512xf32>
    %c0_6 = arith.constant 0 : index
    %c0_7 = arith.constant 0 : index
    %11 = vector.load %arg4[%c0_6, %c0_7] : memref<8x512xf32, #tpu.memory_space<vmem>>, vector<8x512xf32>
    tpu.vector_store %arg4[%c0_6, %c0_7], %10 {strides = array<i32>} : memref<8x512xf32, #tpu.memory_space<vmem>>, vector<8x512xf32>,
    return
  }
  func.func @transform_0(%arg0: i32) -> (i32, i32) {
    %c0_i32 = arith.constant 0 : i32
    %c0_i32_0 = arith.constant 0 : i32
    %c0_i32_1 = arith.constant 0 : i32
    return %c0_i32, %c0_i32_0 : i32, i32
  }
  func.func @transform_1(%arg0: i32) -> (i32, i32) {
    %c0_i32 = arith.constant 0 : i32
    %c0_i32_0 = arith.constant 0 : i32
    return %c0_i32, %arg0 : i32, i32
  }
  func.func @transform_2(%arg0: i32) -> (i32, i32) {
    %c0_i32 = arith.constant 0 : i32
    %c0_i32_0 = arith.constant 0 : i32
    return %c0_i32, %arg0 : i32, i32
  }
  func.func @transform_3(%arg0: i32) -> (i32, i32) {
    %c0_i32 = arith.constant 0 : i32
    %c0_i32_0 = arith.constant 0 : i32
    return %c0_i32, %arg0 : i32, i32
  }
}

</mosaic_0001>

<llo_original>
// kernel: mcvae_retina_forward.9
$region0: #{mcvae_retina_forward.9}
  #allocation0 [shape = 'u32[]', space=smem, size = 0x4, offset = 0x4, fixed_abs, tag = 'smem constant byte address 0x4 - core index']
  #allocation1 [shape = 'u32[144,128]{1,0:T(1,128)}', space=vmem, size = 0x12000, scoped, tag = 'internal scratch']
  %s0 = inlined_call_operand.vmem [shape: bf16[8,128], index: 0, kind: input, shape index: {}]
  %s1 = inlined_call_operand.vmem [shape: bf16[128,256], index: 1, kind: input, shape index: {}]
  %s2 = inlined_call_operand.vmem [shape: f32[1,256], index: 2, kind: input, shape index: {}]
  %s3 = inlined_call_operand.vmem [shape: f32[8,256], index: 3, kind: output, shape index: {}]
  %s4 = sld [smem:[#allocation0]]
  $region22: #{mcvae_retina_forward.9} parent=0
    _
  %s6 = ssub.s32 1, %s4
  %s7 = scalar_select 0, %s6, %s4
  // Predicated region
  $region2: #{mcvae_retina_forward.9} parent=0 // pred_check
    _
  $region3: #{mcvae_retina_forward.9} parent=0 // pred_check_branch
    %9 = sbr.rel (0) target = $region5
  $region4: #{mcvae_retina_forward.9} parent=0 // pred_region
    _
  $region5: #{mcvae_retina_forward.9} parent=0 // pred_fallthru
    _
  // Predicated region
  $region6: #{mcvae_retina_forward.9} parent=0 // pred_check
    _
  $region7: #{mcvae_retina_forward.9} parent=0 // pred_check_branch
    %11 = sbr.rel (0) target = $region9
  $region8: #{mcvae_retina_forward.9} parent=0 // pred_region
    _
  $region9: #{mcvae_retina_forward.9} parent=0 // pred_fallthru
    _
  // Predicated region
  $region10: #{mcvae_retina_forward.9} parent=0 // pred_check
    _
  $region11: #{mcvae_retina_forward.9} parent=0 // pred_check_branch
    %13 = sbr.rel (0) target = $region13
  $region12: #{mcvae_retina_forward.9} parent=0 // pred_region
    _
  $region13: #{mcvae_retina_forward.9} parent=0 // pred_fallthru
    _
  %v15 = vld [vmem:[%s0] sm:$0xf]
  %v16 = vld [vmem:[%s1] sm:$0xff]
  %v17 = vld [vmem:[%s1 + $0x8] sm:$0xff]
  %v18 = vld [vmem:[%s1 + $0x10] sm:$0xff]
  %v19 = vld [vmem:[%s1 + $0x18] sm:$0xff]
  %v20 = vld [vmem:[%s1 + $0x20] sm:$0xff]
  %v21 = vld [vmem:[%s1 + $0x28] sm:$0xff]
  %v22 = vld [vmem:[%s1 + $0x30] sm:$0xff]
  %v23 = vld [vmem:[%s1 + $0x38] sm:$0xff]
  %v24 = vld [vmem:[%s1 + $0x40] sm:$0xff]
  %v25 = vld [vmem:[%s1 + $0x48] sm:$0xff]
  %v26 = vld [vmem:[%s1 + $0x50] sm:$0xff]
  %v27 = vld [vmem:[%s1 + $0x58] sm:$0xff]
  %v28 = vld [vmem:[%s1 + $0x60] sm:$0xff]
  %v29 = vld [vmem:[%s1 + $0x68] sm:$0xff]
  %v30 = vld [vmem:[%s1 + $0x70] sm:$0xff]
  %v31 = vld [vmem:[%s1 + $0x78] sm:$0xff]
  %v32 = vld [vmem:[%s2] sm:$0x3]
  %v34 = vlaneseq
  %v35 = vshrl.u32 %v34, 7
  %v36 = vsub.s32 0, %v35
  %v37 = vrot.slane %v32, %v36
  %v38 = vlaneseq
  %v39 = vshrl.u32 %v38, 7
  %v40 = vsub.s32 1, %v39
  %v41 = vrot.slane %v32, %v40
  %v60 = vunpack.c.l.b16 %v16
  %v61 = vunpack.c.h.b16 %v16
  %v62 = vunpack.c.l.b16 %v17
  %v63 = vunpack.c.h.b16 %v17
  %v64 = vunpack.c.l.b16 %v18
  %v65 = vunpack.c.h.b16 %v18
  %v66 = vunpack.c.l.b16 %v19
  %v67 = vunpack.c.h.b16 %v19
  %v68 = vunpack.c.l.b16 %v20
  %v69 = vunpack.c.h.b16 %v20
  %v70 = vunpack.c.l.b16 %v21
  %v71 = vunpack.c.h.b16 %v21
  %v72 = vunpack.c.l.b16 %v22
  %v73 = vunpack.c.h.b16 %v22
  %v74 = vunpack.c.l.b16 %v23
  %v75 = vunpack.c.h.b16 %v23
  %v76 = vunpack.c.l.b16 %v24
  %v77 = vunpack.c.h.b16 %v24
  %v78 = vunpack.c.l.b16 %v25
  %v79 = vunpack.c.h.b16 %v25
  %v80 = vunpack.c.l.b16 %v26
  %v81 = vunpack.c.h.b16 %v26
  %v82 = vunpack.c.l.b16 %v27
  %v83 = vunpack.c.h.b16 %v27
  %v84 = vunpack.c.l.b16 %v28
  %v85 = vunpack.c.h.b16 %v28
  %v86 = vunpack.c.l.b16 %v29
  %v87 = vunpack.c.h.b16 %v29
  %v88 = vunpack.c.l.b16 %v30
  %v89 = vunpack.c.h.b16 %v30
  %v90 = vunpack.c.l.b16 %v31
  %v91 = vunpack.c.h.b16 %v31
  %v92 = vpack.c.b16 %v62, %v60
  %v93 = vpack.c.b16 %v63, %v61
  %v94 = vpack.c.b16 %v66, %v64
  %v95 = vpack.c.b16 %v67, %v65
  %v96 = vpack.c.b16 %v70, %v68
  %v97 = vpack.c.b16 %v71, %v69
  %v98 = vpack.c.b16 %v74, %v72
  %v99 = vpack.c.b16 %v75, %v73
  %v100 = vpack.c.b16 %v78, %v76
  %v101 = vpack.c.b16 %v79, %v77
  %v102 = vpack.c.b16 %v82, %v80
  %v103 = vpack.c.b16 %v83, %v81
  %v104 = vpack.c.b16 %v86, %v84
  %v105 = vpack.c.b16 %v87, %v85
  %v106 = vpack.c.b16 %v90, %v88
  %v107 = vpack.c.b16 %v91, %v89
  %124 = vmatprep.subr.bf16.mxu0 %v107
  %125 = vmatpush1.bf16.msra.mxu0 %v106
  %126 = vmatprep.subr.bf16.mxu0 %v105
  %127 = vmatpush1.bf16.msra.mxu0 %v104
  %128 = vmatprep.subr.bf16.mxu0 %v103
  %129 = vmatpush1.bf16.msra.mxu0 %v102
  %130 = vmatprep.subr.bf16.mxu0 %v101
  %131 = vmatpush1.bf16.msra.mxu0 %v100
  %132 = vmatprep.subr.bf16.mxu0 %v99
  %133 = vmatpush1.bf16.msra.mxu0 %v98
  %134 = vmatprep.subr.bf16.mxu0 %v97
  %135 = vmatpush1.bf16.msra.mxu0 %v96
  %136 = vmatprep.subr.bf16.mxu0 %v95
  %137 = vmatpush1.bf16.msra.mxu0 %v94
  %138 = vmatprep.subr.bf16.mxu0 %v93
  %139 = vmatpush1.bf16.msra.mxu0 %v92
  %140 = vmatprep.subr.bf16.mxu0 0
  %141 = vmatpush2.bf16.msra.mxu0 0
  %142 = vmatprep.subr.bf16.mxu0 0
  %143 = vmatpush2.bf16.msra.mxu0 0
  %144 = vmatprep.subr.bf16.mxu0 0
  %145 = vmatpush2.bf16.msra.mxu0 0
  %146 = vmatprep.subr.bf16.mxu0 0
  %147 = vmatpush2.bf16.msra.mxu0 0
  %148 = vmatprep.subr.bf16.mxu0 0
  %149 = vmatpush2.bf16.msra.mxu0 0
  %150 = vmatprep.subr.bf16.mxu0 0
  %151 = vmatpush2.bf16.msra.mxu0 0
  %152 = vmatprep.subr.bf16.mxu0 0
  %153 = vmatpush2.bf16.msra.mxu0 0
  %154 = vmatprep.subr.bf16.mxu0 0
  %155 = vmatpush2.bf16.msra.mxu0 0
  %156 = vmatprep.mubr.bf16.mxu0 0
  %157 = vmatmul.mubr.bf16.gmra.mxu0 %v15
  %v158 = vpop.f32.mrf.mxu0
  %v159 = vadd.f32 %v37, %v158
  %v160 = vpop.f32.mrf.mxu0
  %v161 = vadd.f32 %v41, %v160
  %v162 = vpop.f32.mrf.mxu0
  %v163 = vpop.f32.mrf.mxu0
  %164 = vdwg.mxu0
  %v165 = vxor.u32 %v159, 2147483648
  %v166 = vxor.u32 %v161, 2147483648
  %v167 = vmul.f32 %v165, 1.442695
  %v168 = vpow.pop %v167
  %v169 = vmul.f32 %v166, 1.442695
  %v170 = vpow.pop %v169
  %v171 = vadd.f32 %v168, 1.0
  %v172 = vadd.f32 %v170, 1.0
  %v173 = vrcp.pop %v171
  %v174 = vmul.f32 1.0, %v173
  %v175 = vrcp.pop %v172
  %v176 = vmul.f32 1.0, %v175
  %177 = vst [vmem:[%s3] sm:$0xff] %v174
  %178 = vst [vmem:[%s3 + $0x8] sm:$0xff] %v176
  // Predicated region
  $region14: #{mcvae_retina_forward.9} parent=0 // pred_check
    _
  $region15: #{mcvae_retina_forward.9} parent=0 // pred_check_branch
    %180 = sbr.rel (0) target = $region17
  $region16: #{mcvae_retina_forward.9} parent=0 // pred_region
    _
  $region17: #{mcvae_retina_forward.9} parent=0 // pred_fallthru
    _
  // Predicated region
  $region18: #{mcvae_retina_forward.9} parent=0 // pred_check
    _
  $region19: #{mcvae_retina_forward.9} parent=0 // pred_check_branch
    %182 = sbr.rel (0) target = $region21
  $region20: #{mcvae_retina_forward.9} parent=0 // pred_region
    _
  $region21: #{mcvae_retina_forward.9} parent=0 // pred_fallthru
    _

// kernel: mcvae_retina_forward.7
$region0: #{mcvae_retina_forward.7}
  #allocation0 [shape = 'u32[]', space=smem, size = 0x4, offset = 0x4, fixed_abs, tag = 'smem constant byte address 0x4 - core index']
  #allocation1 [shape = 'u32[144,128]{1,0:T(1,128)}', space=vmem, size = 0x12000, scoped, tag = 'internal scratch']
  %s0 = inlined_call_operand.vmem [shape: bf16[8,128], index: 0, kind: input, shape index: {}]
  %s1 = inlined_call_operand.vmem [shape: bf16[128,1024], index: 1, kind: input, shape index: {}]
  %s2 = inlined_call_operand.vmem [shape: f32[1,1024], index: 2, kind: input, shape index: {}]
  %s3 = inlined_call_operand.vmem [shape: f32[8,1024], index: 3, kind: output, shape index: {}]
  %s4 = sld [smem:[#allocation0]]
  $region68: #{mcvae_retina_forward.7} parent=0
    _
  %s6 = ssub.s32 1, %s4
  %s7 = scalar_select 0, %s6, %s4
  $region1: #{mcvae_retina_forward.7} parent=0
    #allocation2 [shape = 'u8[262144]{0}', space=vmem, size = 0x40000, scoped, tag = 'input window, operand 1']
    loop: start=0, step=1, limit=4
    $region2: #{mcvae_retina_forward.7} parent=1 // loop_pre_header
      _
    $region3: #{mcvae_retina_forward.7} parent=1 // loop_header
      %s9 = sphi 0, %s13
      %p10 = scmp.ge.s32.totalorder %s9, 4
      %s17 = sphi 0, %s17
      %s19 = sphi 0, %s17
      %s20 = sphi 0, %s19
      %s34 = sphi 0, %s20
      %s40 = sphi 0, %s42
      %s43 = sphi 0, %s40
      %s44 = sphi 0, %s43
      %s60 = sphi 0, %s44
      %s66 = sphi 0, %s68
      %s69 = sphi 0, %s66
      %s70 = sphi 0, %s69
      %s86 = sphi 0, %s70
      %s92 = sphi 0, %s94
      %s95 = sphi 0, %s92
      %s96 = sphi 0, %s95
      %s112 = sphi 0, %s96
    $region4: #{mcvae_retina_forward.7} parent=1 // loop_header_branch
      %12 = sbr.rel (%p10) target = $region8
    $region5: #{mcvae_retina_forward.7} parent=1 // loop_body
      %s14 = ssub.s32 %s9, 1
      %s15 = ssub.s32 %s9, 2
      %s16 = sadd.s32 %s9, 1
      %s18 = sadd.s32 %s17, 1
      %p21 = scmp.eq.s32.totalorder %s9, 1
      %p22 = scmp.ne.s32.totalorder %s17, %s19
      %p23 = scmp.eq.s32.totalorder %s9, 0
      %p24 = por %p22, %p23
      %p25 = scmp.ne.s32.totalorder %s17, %s19
      %p26 = scmp.eq.s32.totalorder %s14, 1
      %p27 = por %p25, %p26
      %p28 = scmp.ne.s32.totalorder %s19, %s20
      %p29 = scmp.eq.s32.totalorder %s14, 0
      %p30 = por %p28, %p29
      %p31 = scmp.ne.s32.totalorder %s19, %s20
      %p32 = scmp.eq.s32.totalorder %s15, 1
      %p33 = por %p31, %p32
      %p35 = scmp.ne.s32.totalorder %s20, %s34
      %p36 = scmp.eq.s32.totalorder %s15, 0
      %p37 = por %p35, %p36
      %s38 = ssub.s32 %s9, %s16
      %p39 = scmp.eq.s32.totalorder %s38, 0
      %s41 = sadd.s32 %s40, 1
      %s42 = scalar_select %p39, %s40, %s41
      %p45 = pneg %p39
      %p46 = scmp.eq.s32.totalorder %s9, 1
      %p47 = por %p45, %p46
      %p48 = scmp.ne.s32.totalorder %s40, %s43
      %p49 = scmp.eq.s32.totalorder %s9, 0
      %p50 = por %p48, %p49
      %p51 = scmp.ne.s32.totalorder %s40, %s43
      %p52 = scmp.eq.s32.totalorder %s14, 1
      %p53 = por %p51, %p52
      %p54 = scmp.ne.s32.totalorder %s43, %s44
      %p55 = scmp.eq.s32.totalorder %s14, 0
      %p56 = por %p54, %p55
      %p57 = scmp.ne.s32.totalorder %s43, %s44
      %p58 = scmp.eq.s32.totalorder %s15, 1
      %p59 = por %p57, %p58
      %p61 = scmp.ne.s32.totalorder %s44, %s60
      %p62 = scmp.eq.s32.totalorder %s15, 0
      %p63 = por %p61, %p62
      %s64 = ssub.s32 %s9, %s16
      %p65 = scmp.eq.s32.totalorder %s64, 0
      %s67 = sadd.s32 %s66, 1
      %s68 = scalar_select %p65, %s66, %s67
      %p71 = pneg %p65
      %p72 = scmp.eq.s32.totalorder %s9, 1
      %p73 = por %p71, %p72
      %p74 = scmp.ne.s32.totalorder %s66, %s69
      %p75 = scmp.eq.s32.totalorder %s9, 0
      %p76 = por %p74, %p75
      %p77 = scmp.ne.s32.totalorder %s66, %s69
      %p78 = scmp.eq.s32.totalorder %s14, 1
      %p79 = por %p77, %p78
      %p80 = scmp.ne.s32.totalorder %s69, %s70
      %p81 = scmp.eq.s32.totalorder %s14, 0
      %p82 = por %p80, %p81
      %p83 = scmp.ne.s32.totalorder %s69, %s70
      %p84 = scmp.eq.s32.totalorder %s15, 1
      %p85 = por %p83, %p84
      %p87 = scmp.ne.s32.totalorder %s70, %s86
      %p88 = scmp.eq.s32.totalorder %s15, 0
      %p89 = por %p87, %p88
      %s90 = ssub.s32 %s9, %s16
      %p91 = scmp.eq.s32.totalorder %s90, 0
      %s93 = sadd.s32 %s92, 1
      %s94 = scalar_select %p91, %s92, %s93
      %p97 = pneg %p91
      %p98 = scmp.eq.s32.totalorder %s9, 1
      %p99 = por %p97, %p98
      %p100 = scmp.ne.s32.totalorder %s92, %s95
      %p101 = scmp.eq.s32.totalorder %s9, 0
      %p102 = por %p100, %p101
      %p103 = scmp.ne.s32.totalorder %s92, %s95
      %p104 = scmp.eq.s32.totalorder %s14, 1
      %p105 = por %p103, %p104
      %p106 = scmp.ne.s32.totalorder %s95, %s96
      %p107 = scmp.eq.s32.totalorder %s14, 0
      %p108 = por %p106, %p107
      %p109 = scmp.ne.s32.totalorder %s95, %s96
      %p110 = scmp.eq.s32.totalorder %s15, 1
      %p111 = por %p109, %p110
      %p113 = scmp.ne.s32.totalorder %s96, %s112
      %p114 = scmp.eq.s32.totalorder %s15, 0
      %p115 = por %p113, %p114
      %p116 = scmp.le.s32.totalorder 1, %s9
      %p117 = scmp.lt.s32.totalorder %s9, 3
      %p118 = pnand %p116, %p117
      %p119 = pneg %p118
      // Predicated region
      $region9: #{mcvae_retina_forward.7} parent=5 // pred_check
        _
      $region10: #{mcvae_retina_forward.7} parent=5 // pred_check_branch
        %121 = sbr.rel (%p118) target = $region12
      $region11: #{mcvae_retina_forward.7} parent=5 // pred_region
        %s122 = ssub.s32 %s9, 1
        // Predicated region
        $region13: #{mcvae_retina_forward.7} parent=11 // pred_check
          %p123 = pneg %p30
        $region14: #{mcvae_retina_forward.7} parent=11 // pred_check_branch
          %125 = sbr.rel (%p123) target = $region16
        $region15: #{mcvae_retina_forward.7} parent=11 // pred_region
          _
        $region16: #{mcvae_retina_forward.7} parent=11 // pred_fallthru
          _
      $region12: #{mcvae_retina_forward.7} parent=5 // pred_fallthru
        _
      %p126 = scmp.lt.s32.totalorder %s9, 2
      // Predicated region
      $region17: #{mcvae_retina_forward.7} parent=5 // pred_check
        %p127 = pneg %p126
      $region18: #{mcvae_retina_forward.7} parent=5 // pred_check_branch
        %129 = sbr.rel (%p127) target = $region20
      $region19: #{mcvae_retina_forward.7} parent=5 // pred_region
        // Predicated region
        $region21: #{mcvae_retina_forward.7} parent=19 // pred_check
          %p130 = pneg %p50
        $region22: #{mcvae_retina_forward.7} parent=19 // pred_check_branch
          %132 = sbr.rel (%p130) target = $region24
        $region23: #{mcvae_retina_forward.7} parent=19 // pred_region
          %s133 = sand.u32 %s40, 1
          %s134 = sand.u32 %s40, 1
          %s135 = smul.addr %s134, 256
          %s136 = scalar_lea.vmem [#allocation2], %s135
          %s137 = smul.u32 4, %s9
          %s138 = smul.addr %s137, 4
          %s139 = scalar_lea.vmem %s1, %s138
          // Predicated region
          $region25: #{mcvae_retina_forward.7} parent=23 // pred_check
            _
          $region26: #{mcvae_retina_forward.7} parent=23 // pred_check_branch
            %141 = sbr.rel (0) target = $region28
          $region27: #{mcvae_retina_forward.7} parent=23 // pred_region
            // Predicated region
            $region29: #{mcvae_retina_forward.7} parent=27 // pred_check
              _
            $region30: #{mcvae_retina_forward.7} parent=27 // pred_check_branch
              %143 = sbr.rel (0) target = $region32
            $region31: #{mcvae_retina_forward.7} parent=27 // pred_region
              loop: start=0, step=1, limit=1
              $region33: #{mcvae_retina_forward.7} parent=31 // loop_pre_header
                _
              $region34: #{mcvae_retina_forward.7} parent=31 // loop_header
                %s145 = sphi 0, %s149
                %p146 = scmp.ge.s32.totalorder %s145, 1
                %s150 = sphi %s139, %s139
                %s151 = sphi %s136, %s136
              $region35: #{mcvae_retina_forward.7} parent=31 // loop_header_branch
                %148 = sbr.rel (%p146) target = $region39
              $region36: #{mcvae_retina_forward.7} parent=31 // loop_body
                %v152 = vld [vmem:[%s150] sm:$0xff]
                %153 = vst [vmem:[%s151] sm:$0xff] %v152
                %v154 = vld [vmem:[%s150 + $0x8] sm:$0xff]
                %155 = vst [vmem:[%s151 + $0x8] sm:$0xff] %v154
                %v156 = vld [vmem:[%s150 + $0x20] sm:$0xff]
                %157 = vst [vmem:[%s151 + $0x10] sm:$0xff] %v156
                %v158 = vld [vmem:[%s150 + $0x28] sm:$0xff]
                %159 = vst [vmem:[%s151 + $0x18] sm:$0xff] %v158
                %v160 = vld [vmem:[%s150 + $0x40] sm:$0xff]
                %161 = vst [vmem:[%s151 + $0x20] sm:$0xff] %v160
                %v162 = vld [vmem:[%s150 + $0x48] sm:$0xff]
                %163 = vst [vmem:[%s151 + $0x28] sm:$0xff] %v162
                %v164 = vld [vmem:[%s150 + $0x60] sm:$0xff]
                %165 = vst [vmem:[%s151 + $0x30] sm:$0xff] %v164
                %v166 = vld [vmem:[%s150 + $0x68] sm:$0xff]
                %167 = vst [vmem:[%s151 + $0x38] sm:$0xff] %v166
                %v168 = vld [vmem:[%s150 + $0x80] sm:$0xff]
                %169 = vst [vmem:[%s151 + $0x40] sm:$0xff] %v168
                %v170 = vld [vmem:[%s150 + $0x88] sm:$0xff]
                %171 = vst [vmem:[%s151 + $0x48] sm:$0xff] %v170
                %v172 = vld [vmem:[%s150 + $0xa0] sm:$0xff]
                %173 = vst [vmem:[%s151 + $0x50] sm:$0xff] %v172
                %v174 = vld [vmem:[%s150 + $0xa8] sm:$0xff]
                %175 = vst [vmem:[%s151 + $0x58] sm:$0xff] %v174
                %v176 = vld [vmem:[%s150 + $0xc0] sm:$0xff]
                %177 = vst [vmem:[%s151 + $0x60] sm:$0xff] %v176
                %v178 = vld [vmem:[%s150 + $0xc8] sm:$0xff]
                %179 = vst [vmem:[%s151 + $0x68] sm:$0xff] %v178
                %v180 = vld [vmem:[%s150 + $0xe0] sm:$0xff]
                %181 = vst [vmem:[%s151 + $0x70] sm:$0xff] %v180
                %v182 = vld [vmem:[%s150 + $0xe8] sm:$0xff]
                %183 = vst [vmem:[%s151 + $0x78] sm:$0xff] %v182
                %v184 = vld [vmem:[%s150 + $0x100] sm:$0xff]
                %185 = vst [vmem:[%s151 + $0x80] sm:$0xff] %v184
                %v186 = vld [vmem:[%s150 + $0x108] sm:$0xff]
                %187 = vst [vmem:[%s151 + $0x88] sm:$0xff] %v186
                %v188 = vld [vmem:[%s150 + $0x120] sm:$0xff]
                %189 = vst [vmem:[%s151 + $0x90] sm:$0xff] %v188
                %v190 = vld [vmem:[%s150 + $0x128] sm:$0xff]
                %191 = vst [vmem:[%s151 + $0x98] sm:$0xff] %v190
                %v192 = vld [vmem:[%s150 + $0x140] sm:$0xff]
                %193 = vst [vmem:[%s151 + $0xa0] sm:$0xff] %v192
                %v194 = vld [vmem:[%s150 + $0x148] sm:$0xff]
                %195 = vst [vmem:[%s151 + $0xa8] sm:$0xff] %v194
                %v196 = vld [vmem:[%s150 + $0x160] sm:$0xff]
                %197 = vst [vmem:[%s151 + $0xb0] sm:$0xff] %v196
                %v198 = vld [vmem:[%s150 + $0x168] sm:$0xff]
                %199 = vst [vmem:[%s151 + $0xb8] sm:$0xff] %v198
                %v200 = vld [vmem:[%s150 + $0x180] sm:$0xff]
                %201 = vst [vmem:[%s151 + $0xc0] sm:$0xff] %v200
                %v202 = vld [vmem:[%s150 + $0x188] sm:$0xff]
                %203 = vst [vmem:[%s151 + $0xc8] sm:$0xff] %v202
                %v204 = vld [vmem:[%s150 + $0x1a0] sm:$0xff]
                %205 = vst [vmem:[%s151 + $0xd0] sm:$0xff] %v204
                %v206 = vld [vmem:[%s150 + $0x1a8] sm:$0xff]
                %207 = vst [vmem:[%s151 + $0xd8] sm:$0xff] %v206
                %v208 = vld [vmem:[%s150 + $0x1c0] sm:$0xff]
                %209 = vst [vmem:[%s151 + $0xe0] sm:$0xff] %v208
                %v210 = vld [vmem:[%s150 + $0x1c8] sm:$0xff]
                %211 = vst [vmem:[%s151 + $0xe8] sm:$0xff] %v210
                %v212 = vld [vmem:[%s150 + $0x1e0] sm:$0xff]
                %213 = vst [vmem:[%s151 + $0xf0] sm:$0xff] %v212
                %v214 = vld [vmem:[%s150 + $0x1e8] sm:$0xff]
                %215 = vst [vmem:[%s151 + $0xf8] sm:$0xff] %v214
              $region37: #{mcvae_retina_forward.7} parent=31 // loop_footer
                %s149 = sadd.s32 1, %s145
              $region38: #{mcvae_retina_forward.7} parent=31 // loop_footer_branch
                %144 = sbr.rel target = $region34
              $region39: #{mcvae_retina_forward.7} parent=31 // loop_exit
                _
            $region32: #{mcvae_retina_forward.7} parent=27 // pred_fallthru
              _
            // Predicated region
            $region40: #{mcvae_retina_forward.7} parent=27 // pred_check
              _
            $region41: #{mcvae_retina_forward.7} parent=27 // pred_check_branch
              %217 = sbr.rel target = $region43
            $region42: #{mcvae_retina_forward.7} parent=27 // pred_region
              _
            $region43: #{mcvae_retina_forward.7} parent=27 // pred_fallthru
              _
          $region28: #{mcvae_retina_forward.7} parent=23 // pred_fallthru
            _
          %218 = vnop
        $region24: #{mcvae_retina_forward.7} parent=19 // pred_fallthru
          _
        // Predicated region
        $region44: #{mcvae_retina_forward.7} parent=19 // pred_check
          %p219 = pneg %p76
        $region45: #{mcvae_retina_forward.7} parent=19 // pred_check_branch
          %221 = sbr.rel (%p219) target = $region47
        $region46: #{mcvae_retina_forward.7} parent=19 // pred_region
          %s222 = smul.u32 4, %s9
          %p223 = scmp.lt.s32.totalorder %s222, 7
          %s224 = scalar_select %p223, %s222, 7
          %s225 = scalar_lea.vmem %s2, %s224
          %s226 = smul.u32 4, %s9
        $region47: #{mcvae_retina_forward.7} parent=19 // pred_fallthru
          _
      $region20: #{mcvae_retina_forward.7} parent=5 // pred_fallthru
        _
      %p227 = scmp.le.s32.totalorder 1, %s9
      %p228 = scmp.lt.s32.totalorder %s9, 3
      %p229 = pnand %p227, %p228
      %p230 = pneg %p229
      // Predicated region
      $region48: #{mcvae_retina_forward.7} parent=5 // pred_check
        _
      $region49: #{mcvae_retina_forward.7} parent=5 // pred_check_branch
        %232 = sbr.rel (%p229) target = $region51
      $region50: #{mcvae_retina_forward.7} parent=5 // pred_region
        %s233 = ssub.s32 %s9, 1
        %s234 = sand.u32 %s43, 1
        %s235 = sand.u32 %s43, 1
        %s236 = smul.addr %s235, 256
        %s237 = scalar_lea.vmem [#allocation2], %s236
        // Predicated region
        $region52: #{mcvae_retina_forward.7} parent=50 // pred_check
          %p238 = pneg %p56
        $region53: #{mcvae_retina_forward.7} parent=50 // pred_check_branch
          %240 = sbr.rel (%p238) target = $region55
        $region54: #{mcvae_retina_forward.7} parent=50 // pred_region
          _
        $region55: #{mcvae_retina_forward.7} parent=50 // pred_fallthru
          _
        %p241 = pneg %p30
        %p242 = pneg %p27
        %s243 = sand.u32 %s43, 1
        %s244 = sand.u32 %s43, 1
        %s245 = smul.addr %s244, 256
        %s246 = scalar_lea.vmem [#allocation2], %s245
        %p247 = pneg %p56
        %p248 = pneg %p53
        %s249 = smul.u32 4, %s14
        %p250 = scmp.lt.s32.totalorder %s249, 7
        %s251 = scalar_select %p250, %s249, 7
        %s252 = scalar_lea.vmem %s2, %s251
        %p253 = pneg %p82
        %p254 = pneg %p79
        %p255 = pneg %p108
        %p256 = pneg %p105
        %s257 = smul.u32 4, %s14
        %p258 = scmp.lt.s32.totalorder %s257, 7
        %s259 = scalar_select %p258, %s257, 7
        %s260 = smul.addr %s259, 8
        %s261 = scalar_lea.vmem %s3, %s260
        %s262 = smul.u32 4, %s14
        %s263 = smul.u32 4, %s14
        %p264 = scmp.lt.s32.totalorder %s263, 7
        %s265 = scalar_select %p264, %s263, 7
        %s266 = scalar_lea.vmem %s2, %s265
        %s267 = smul.u32 4, %s14
        %s268 = smul.u32 4, %s14
        %p269 = scmp.lt.s32.totalorder %s268, 7
        %s270 = scalar_select %p269, %s268, 7
        %s271 = smul.addr %s270, 8
        %s272 = scalar_lea.vmem %s3, %s271
        %s273 = smul.u32 4, %s14
        %v275 = vld [vmem:[%s0] sm:$0xf]
        %v276 = vld [vmem:[%s237] sm:$0xff]
        %v277 = vld [vmem:[%s237 + $0x8] sm:$0xff]
        %v278 = vld [vmem:[%s237 + $0x10] sm:$0xff]
        %v279 = vld [vmem:[%s237 + $0x18] sm:$0xff]
        %v280 = vld [vmem:[%s237 + $0x20] sm:$0xff]
        %v281 = vld [vmem:[%s237 + $0x28] sm:$0xff]
        %v282 = vld [vmem:[%s237 + $0x30] sm:$0xff]
        %v283 = vld [vmem:[%s237 + $0x38] sm:$0xff]
        %v284 = vld [vmem:[%s237 + $0x40] sm:$0xff]
        %v285 = vld [vmem:[%s237 + $0x48] sm:$0xff]
        %v286 = vld [vmem:[%s237 + $0x50] sm:$0xff]
        %v287 = vld [vmem:[%s237 + $0x58] sm:$0xff]
        %v288 = vld [vmem:[%s237 + $0x60] sm:$0xff]
        %v289 = vld [vmem:[%s237 + $0x68] sm:$0xff]
        %v290 = vld [vmem:[%s237 + $0x70] sm:$0xff]
        %v291 = vld [vmem:[%s237 + $0x78] sm:$0xff]
        %v292 = vld [vmem:[%s237 + $0x80] sm:$0xff]
        %v293 = vld [vmem:[%s237 + $0x88] sm:$0xff]
        %v294 = vld [vmem:[%s237 + $0x90] sm:$0xff]
        %v295 = vld [vmem:[%s237 + $0x98] sm:$0xff]
        %v296 = vld [vmem:[%s237 + $0xa0] sm:$0xff]
        %v297 = vld [vmem:[%s237 + $0xa8] sm:$0xff]
        %v298 = vld [vmem:[%s237 + $0xb0] sm:$0xff]
        %v299 = vld [vmem:[%s237 + $0xb8] sm:$0xff]
        %v300 = vld [vmem:[%s237 + $0xc0] sm:$0xff]
        %v301 = vld [vmem:[%s237 + $0xc8] sm:$0xff]
        %v302 = vld [vmem:[%s237 + $0xd0] sm:$0xff]
        %v303 = vld [vmem:[%s237 + $0xd8] sm:$0xff]
        %v304 = vld [vmem:[%s237 + $0xe0] sm:$0xff]
        %v305 = vld [vmem:[%s237 + $0xe8] sm:$0xff]
        %v306 = vld [vmem:[%s237 + $0xf0] sm:$0xff]
        %v307 = vld [vmem:[%s237 + $0xf8] sm:$0xff]
        %v308 = vld [vmem:[%s266] sm:$0xf]
        %v310 = vlaneseq
        %v311 = vshrl.u32 %v310, 7
        %v312 = vsub.s32 0, %v311
        %v313 = vrot.slane %v308, %v312
        %v314 = vlaneseq
        %v315 = vshrl.u32 %v314, 7
        %v316 = vsub.s32 1, %v315
        %v317 = vrot.slane %v308, %v316
        %v318 = vlaneseq
        %v319 = vshrl.u32 %v318, 7
        %v320 = vsub.s32 2, %v319
        %v321 = vrot.slane %v308, %v320
        %v322 = vlaneseq
        %v323 = vshrl.u32 %v322, 7
        %v324 = vsub.s32 3, %v323
        %v325 = vrot.slane %v308, %v324
        %v362 = vunpack.c.l.b16 %v276
        %v363 = vunpack.c.h.b16 %v276
        %v364 = vunpack.c.l.b16 %v277
        %v365 = vunpack.c.h.b16 %v277
        %v366 = vunpack.c.l.b16 %v278
        %v367 = vunpack.c.h.b16 %v278
        %v368 = vunpack.c.l.b16 %v279
        %v369 = vunpack.c.h.b16 %v279
        %v370 = vunpack.c.l.b16 %v280
        %v371 = vunpack.c.h.b16 %v280
        %v372 = vunpack.c.l.b16 %v281
        %v373 = vunpack.c.h.b16 %v281
        %v374 = vunpack.c.l.b16 %v282
        %v375 = vunpack.c.h.b16 %v282
        %v376 = vunpack.c.l.b16 %v283
        %v377 = vunpack.c.h.b16 %v283
        %v378 = vunpack.c.l.b16 %v284
        %v379 = vunpack.c.h.b16 %v284
        %v380 = vunpack.c.l.b16 %v285
        %v381 = vunpack.c.h.b16 %v285
        %v382 = vunpack.c.l.b16 %v286
        %v383 = vunpack.c.h.b16 %v286
        %v384 = vunpack.c.l.b16 %v287
        %v385 = vunpack.c.h.b16 %v287
        %v386 = vunpack.c.l.b16 %v288
        %v387 = vunpack.c.h.b16 %v288
        %v388 = vunpack.c.l.b16 %v289
        %v389 = vunpack.c.h.b16 %v289
        %v390 = vunpack.c.l.b16 %v290
        %v391 = vunpack.c.h.b16 %v290
        %v392 = vunpack.c.l.b16 %v291
        %v393 = vunpack.c.h.b16 %v291
        %v394 = vunpack.c.l.b16 %v292
        %v395 = vunpack.c.h.b16 %v292
        %v396 = vunpack.c.l.b16 %v293
        %v397 = vunpack.c.h.b16 %v293
        %v398 = vunpack.c.l.b16 %v294
        %v399 = vunpack.c.h.b16 %v294
        %v400 = vunpack.c.l.b16 %v295
        %v401 = vunpack.c.h.b16 %v295
        %v402 = vunpack.c.l.b16 %v296
        %v403 = vunpack.c.h.b16 %v296
        %v404 = vunpack.c.l.b16 %v297
        %v405 = vunpack.c.h.b16 %v297
        %v406 = vunpack.c.l.b16 %v298
        %v407 = vunpack.c.h.b16 %v298
        %v408 = vunpack.c.l.b16 %v299
        %v409 = vunpack.c.h.b16 %v299
        %v410 = vunpack.c.l.b16 %v300
        %v411 = vunpack.c.h.b16 %v300
        %v412 = vunpack.c.l.b16 %v301
        %v413 = vunpack.c.h.b16 %v301
        %v414 = vunpack.c.l.b16 %v302
        %v415 = vunpack.c.h.b16 %v302
        %v416 = vunpack.c.l.b16 %v303
        %v417 = vunpack.c.h.b16 %v303
        %v418 = vunpack.c.l.b16 %v304
        %v419 = vunpack.c.h.b16 %v304
        %v420 = vunpack.c.l.b16 %v305
        %v421 = vunpack.c.h.b16 %v305
        %v422 = vunpack.c.l.b16 %v306
        %v423 = vunpack.c.h.b16 %v306
        %v424 = vunpack.c.l.b16 %v307
        %v425 = vunpack.c.h.b16 %v307
        %v426 = vpack.c.b16 %v366, %v362
        %v427 = vpack.c.b16 %v367, %v363
        %v428 = vpack.c.b16 %v368, %v364
        %v429 = vpack.c.b16 %v369, %v365
        %v430 = vpack.c.b16 %v374, %v370
        %v431 = vpack.c.b16 %v375, %v371
        %v432 = vpack.c.b16 %v376, %v372
        %v433 = vpack.c.b16 %v377, %v373
        %v434 = vpack.c.b16 %v382, %v378
        %v435 = vpack.c.b16 %v383, %v379
        %v436 = vpack.c.b16 %v384, %v380
        %v437 = vpack.c.b16 %v385, %v381
        %v438 = vpack.c.b16 %v390, %v386
        %v439 = vpack.c.b16 %v391, %v387
        %v440 = vpack.c.b16 %v392, %v388
        %v441 = vpack.c.b16 %v393, %v389
        %v442 = vpack.c.b16 %v398, %v394
        %v443 = vpack.c.b16 %v399, %v395
        %v444 = vpack.c.b16 %v400, %v396
        %v445 = vpack.c.b16 %v401, %v397
        %v446 = vpack.c.b16 %v406, %v402
        %v447 = vpack.c.b16 %v407, %v403
        %v448 = vpack.c.b16 %v408, %v404
        %v449 = vpack.c.b16 %v409, %v405
        %v450 = vpack.c.b16 %v414, %v410
        %v451 = vpack.c.b16 %v415, %v411
        %v452 = vpack.c.b16 %v416, %v412
        %v453 = vpack.c.b16 %v417, %v413
        %v454 = vpack.c.b16 %v422, %v418
        %v455 = vpack.c.b16 %v423, %v419
        %v456 = vpack.c.b16 %v424, %v420
        %v457 = vpack.c.b16 %v425, %v421
        %490 = vmatprep.subr.bf16.mxu0 %v455
        %491 = vmatpush1.bf16.msra.mxu0 %v454
        %492 = vmatprep.subr.bf16.mxu0 %v451
        %493 = vmatpush1.bf16.msra.mxu0 %v450
        %494 = vmatprep.subr.bf16.mxu0 %v447
        %495 = vmatpush1.bf16.msra.mxu0 %v446
        %496 = vmatprep.subr.bf16.mxu0 %v443
        %497 = vmatpush1.bf16.msra.mxu0 %v442
        %498 = vmatprep.subr.bf16.mxu0 %v439
        %499 = vmatpush1.bf16.msra.mxu0 %v438
        %500 = vmatprep.subr.bf16.mxu0 %v435
        %501 = vmatpush1.bf16.msra.mxu0 %v434
        %502 = vmatprep.subr.bf16.mxu0 %v431
        %503 = vmatpush1.bf16.msra.mxu0 %v430
        %504 = vmatprep.subr.bf16.mxu0 %v427
        %505 = vmatpush1.bf16.msra.mxu0 %v426
        %506 = vmatprep.subr.bf16.mxu0 0
        %507 = vmatpush2.bf16.msra.mxu0 0
        %508 = vmatprep.subr.bf16.mxu0 0
        %509 = vmatpush2.bf16.msra.mxu0 0
        %510 = vmatprep.subr.bf16.mxu0 0
        %511 = vmatpush2.bf16.msra.mxu0 0
        %512 = vmatprep.subr.bf16.mxu0 0
        %513 = vmatpush2.bf16.msra.mxu0 0
        %514 = vmatprep.subr.bf16.mxu0 0
        %515 = vmatpush2.bf16.msra.mxu0 0
        %516 = vmatprep.subr.bf16.mxu0 0
        %517 = vmatpush2.bf16.msra.mxu0 0
        %518 = vmatprep.subr.bf16.mxu0 0
        %519 = vmatpush2.bf16.msra.mxu0 0
        %520 = vmatprep.subr.bf16.mxu0 0
        %521 = vmatpush2.bf16.msra.mxu0 0
        %522 = vmatprep.mubr.bf16.mxu0 0
        %523 = vmatmul.mubr.bf16.gmra.mxu0 %v275
        %v524 = vpop.f32.mrf.mxu0
        %v525 = vadd.f32 %v313, %v524
        %v526 = vpop.f32.mrf.mxu0
        %v527 = vadd.f32 %v317, %v526
        %v528 = vpop.f32.mrf.mxu0
        %v529 = vpop.f32.mrf.mxu0
        %530 = vdwg.mxu0
        %531 = vmatprep.subr.bf16.mxu0 %v457
        %532 = vmatpush1.bf16.msra.mxu0 %v456
        %533 = vmatprep.subr.bf16.mxu0 %v453
        %534 = vmatpush1.bf16.msra.mxu0 %v452
        %535 = vmatprep.subr.bf16.mxu0 %v449
        %536 = vmatpush1.bf16.msra.mxu0 %v448
        %537 = vmatprep.subr.bf16.mxu0 %v445
        %538 = vmatpush1.bf16.msra.mxu0 %v444
        %539 = vmatprep.subr.bf16.mxu0 %v441
        %540 = vmatpush1.bf16.msra.mxu0 %v440
        %541 = vmatprep.subr.bf16.mxu0 %v437
        %542 = vmatpush1.bf16.msra.mxu0 %v436
        %543 = vmatprep.subr.bf16.mxu0 %v433
        %544 = vmatpush1.bf16.msra.mxu0 %v432
        %545 = vmatprep.subr.bf16.mxu0 %v429
        %546 = vmatpush1.bf16.msra.mxu0 %v428
        %547 = vmatprep.subr.bf16.mxu0 0
        %548 = vmatpush2.bf16.msra.mxu0 0
        %549 = vmatprep.subr.bf16.mxu0 0
        %550 = vmatpush2.bf16.msra.mxu0 0
        %551 = vmatprep.subr.bf16.mxu0 0
        %552 = vmatpush2.bf16.msra.mxu0 0
        %553 = vmatprep.subr.bf16.mxu0 0
        %554 = vmatpush2.bf16.msra.mxu0 0
        %555 = vmatprep.subr.bf16.mxu0 0
        %556 = vmatpush2.bf16.msra.mxu0 0
        %557 = vmatprep.subr.bf16.mxu0 0
        %558 = vmatpush2.bf16.msra.mxu0 0
        %559 = vmatprep.subr.bf16.mxu0 0
        %560 = vmatpush2.bf16.msra.mxu0 0
        %561 = vmatprep.subr.bf16.mxu0 0
        %562 = vmatpush2.bf16.msra.mxu0 0
        %563 = vmatprep.mubr.bf16.mxu0 0
        %564 = vmatmul.mubr.bf16.gmra.mxu0 %v275
        %v565 = vpop.f32.mrf.mxu0
        %v566 = vadd.f32 %v321, %v565
        %v567 = vpop.f32.mrf.mxu0
        %v568 = vadd.f32 %v325, %v567
        %v569 = vpop.f32.mrf.mxu0
        %v570 = vpop.f32.mrf.mxu0
        %571 = vdwg.mxu0
        %v572 = vxor.u32 %v525, 2147483648
        %v573 = vxor.u32 %v527, 2147483648
        %v574 = vxor.u32 %v566, 2147483648
        %v575 = vxor.u32 %v568, 2147483648
        %v576 = vmul.f32 %v572, 1.442695
        %v577 = vpow.pop %v576
        %v578 = vmul.f32 %v573, 1.442695
        %v579 = vpow.pop %v578
        %v580 = vmul.f32 %v574, 1.442695
        %v581 = vpow.pop %v580
        %v582 = vmul.f32 %v575, 1.442695
        %v583 = vpow.pop %v582
        %v584 = vadd.f32 %v577, 1.0
        %v585 = vadd.f32 %v579, 1.0
        %v586 = vadd.f32 %v581, 1.0
        %v587 = vadd.f32 %v583, 1.0
        %v588 = vrcp.pop %v584
        %v589 = vmul.f32 1.0, %v588
        %v590 = vrcp.pop %v585
        %v591 = vmul.f32 1.0, %v590
        %v592 = vrcp.pop %v586
        %v593 = vmul.f32 1.0, %v592
        %v594 = vrcp.pop %v587
        %v595 = vmul.f32 1.0, %v594
        %596 = vst [vmem:[%s272] sm:$0xff] %v589
        %597 = vst [vmem:[%s272 + $0x8] sm:$0xff] %v591
        %598 = vst [vmem:[%s272 + $0x10] sm:$0xff] %v593
        %599 = vst [vmem:[%s272 + $0x18] sm:$0xff] %v595
        %s600 = smul.u32 4, %s14
        %p601 = scmp.lt.s32.totalorder %s600, 7
        %s602 = scalar_select %p601, %s600, 7
        %s603 = smul.addr %s602, 8
        %s604 = scalar_lea.vmem %s3, %s603
        // Predicated region
        $region56: #{mcvae_retina_forward.7} parent=50 // pred_check
          %p605 = pneg %p105
        $region57: #{mcvae_retina_forward.7} parent=50 // pred_check_branch
          %607 = sbr.rel (%p605) target = $region59
        $region58: #{mcvae_retina_forward.7} parent=50 // pred_region
          %s608 = smul.u32 4, %s14
        $region59: #{mcvae_retina_forward.7} parent=50 // pred_fallthru
          _
      $region51: #{mcvae_retina_forward.7} parent=5 // pred_fallthru
        _
      %p609 = scmp.le.s32.totalorder 2, %s9
      // Predicated region
      $region60: #{mcvae_retina_forward.7} parent=5 // pred_check
        %p610 = pneg %p609
      $region61: #{mcvae_retina_forward.7} parent=5 // pred_check_branch
        %612 = sbr.rel (%p610) target = $region63
      $region62: #{mcvae_retina_forward.7} parent=5 // pred_region
        %s613 = ssub.s32 %s9, 2
        // Predicated region
        $region64: #{mcvae_retina_forward.7} parent=62 // pred_check
          %p614 = pneg %p111
        $region65: #{mcvae_retina_forward.7} parent=62 // pred_check_branch
          %616 = sbr.rel (%p614) target = $region67
        $region66: #{mcvae_retina_forward.7} parent=62 // pred_region
          %s617 = smul.u32 4, %s15
          %p618 = scmp.lt.s32.totalorder %s617, 7
          %s619 = scalar_select %p618, %s617, 7
          %s620 = smul.addr %s619, 8
          %s621 = scalar_lea.vmem %s3, %s620
        $region67: #{mcvae_retina_forward.7} parent=62 // pred_fallthru
          _
      $region63: #{mcvae_retina_forward.7} parent=5 // pred_fallthru
        _
    $region6: #{mcvae_retina_forward.7} parent=1 // loop_footer
      %s13 = sadd.s32 1, %s9
    $region7: #{mcvae_retina_forward.7} parent=1 // loop_footer_branch
      %8 = sbr.rel target = $region3
    $region8: #{mcvae_retina_forward.7} parent=1 // loop_exit
      _

// kernel: mcvae_retina_forward.8
$region0: #{mcvae_retina_forward.8}
  #allocation0 [shape = 'u32[]', space=smem, size = 0x4, offset = 0x4, fixed_abs, tag = 'smem constant byte address 0x4 - core index']
  #allocation1 [shape = 'u32[144,128]{1,0:T(1,128)}', space=vmem, size = 0x12000, scoped, tag = 'internal scratch']
  #allocation2 [shape = 'f32[8,128]{1,0:T(8,128)}', space=vmem, size = 0x1000, scoped, tag = 'scratch operand']
  %s0 = inlined_call_operand.vmem [shape: bf16[8,256], index: 0, kind: input, shape index: {}]
  %s1 = inlined_call_operand.vmem [shape: bf16[256,128], index: 1, kind: input, shape index: {}]
  %s2 = inlined_call_operand.vmem [shape: f32[1,128], index: 2, kind: input, shape index: {}]
  %s3 = inlined_call_operand.vmem [shape: bf16[128,256], index: 3, kind: input, shape index: {}]
  %s4 = inlined_call_operand.vmem [shape: f32[1,256], index: 4, kind: input, shape index: {}]
  %s5 = inlined_call_operand.hbm [shape: bf16[128,128], index: 5, kind: input, shape index: {}]
  %s6 = inlined_call_operand.vmem [shape: f32[1,128], index: 6, kind: input, shape index: {}]
  %s7 = inlined_call_operand.vmem [shape: f32[8,128], index: 7, kind: input, shape index: {}]
  %s8 = inlined_call_operand.vmem [shape: f32[8,128], index: 8, kind: input, shape index: {}]
  %s9 = inlined_call_operand.vmem [shape: f32[8,384], index: 9, kind: output, shape index: {0}]
  %s10 = inlined_call_operand.vmem [shape: bf16[8,128], index: 10, kind: output, shape index: {1}]
  %11 = xla_tuple %s9, %s10
  %s12 = sld [smem:[#allocation0]]
  $region66: #{mcvae_retina_forward.8} parent=0
    _
  %s14 = ssub.s32 1, %s12
  %s15 = scalar_select 0, %s14, %s12
  $region1: #{mcvae_retina_forward.8} parent=0
    #allocation3 [shape = 'u8[32768]{0}', space=vmem, size = 0x8000, scoped, tag = 'input window, operand 5, single buffered']
    #allocation4 [shape = 's32[1]{0}', space=sflag, size = 0x4, scoped, tag = 'scoped memory for mcvae_retina_forward.8']
    %16 = vsyncpa [#allocation4], 0
    // Predicated region
    $region2: #{mcvae_retina_forward.8} parent=1 // pred_check
      _
    $region3: #{mcvae_retina_forward.8} parent=1 // pred_check_branch
      %18 = sbr.rel (0) target = $region5
    $region4: #{mcvae_retina_forward.8} parent=1 // pred_region
      _
    $region5: #{mcvae_retina_forward.8} parent=1 // pred_fallthru
      _
    // Predicated region
    $region6: #{mcvae_retina_forward.8} parent=1 // pred_check
      _
    $region7: #{mcvae_retina_forward.8} parent=1 // pred_check_branch
      %20 = sbr.rel (0) target = $region9
    $region8: #{mcvae_retina_forward.8} parent=1 // pred_region
      _
    $region9: #{mcvae_retina_forward.8} parent=1 // pred_fallthru
      _
    // Predicated region
    $region10: #{mcvae_retina_forward.8} parent=1 // pred_check
      _
    $region11: #{mcvae_retina_forward.8} parent=1 // pred_check_branch
      %22 = sbr.rel (0) target = $region13
    $region12: #{mcvae_retina_forward.8} parent=1 // pred_region
      _
    $region13: #{mcvae_retina_forward.8} parent=1 // pred_fallthru
      _
    // Predicated region
    $region14: #{mcvae_retina_forward.8} parent=1 // pred_check
      _
    $region15: #{mcvae_retina_forward.8} parent=1 // pred_check_branch
      %24 = sbr.rel (0) target = $region17
    $region16: #{mcvae_retina_forward.8} parent=1 // pred_region
      _
    $region17: #{mcvae_retina_forward.8} parent=1 // pred_fallthru
      _
    // Predicated region
    $region18: #{mcvae_retina_forward.8} parent=1 // pred_check
      _
    $region19: #{mcvae_retina_forward.8} parent=1 // pred_check_branch
      %26 = sbr.rel (0) target = $region21
    $region20: #{mcvae_retina_forward.8} parent=1 // pred_region
      _
    $region21: #{mcvae_retina_forward.8} parent=1 // pred_fallthru
      _
    // Predicated region
    $region22: #{mcvae_retina_forward.8} parent=1 // pred_check
      _
    $region23: #{mcvae_retina_forward.8} parent=1 // pred_check_branch
      %28 = sbr.rel (0) target = $region25
    $region24: #{mcvae_retina_forward.8} parent=1 // pred_region
      %s30 = ssub.s32 1024, 1024
      %31 = vsyncadd [#allocation4], %s30
      %s32 = sshll.u32 [#allocation3], 4
      %s33 = int_to_ptr.vmem [resolvable:$true] %s32
      %38 = dma.hbm_to_vmem [thread:$0]  %s5, 1024, %s33, [#allocation4], 64, 64, 4
    $region25: #{mcvae_retina_forward.8} parent=1 // pred_fallthru
      _
    // Predicated region
    $region26: #{mcvae_retina_forward.8} parent=1 // pred_check
      _
    $region27: #{mcvae_retina_forward.8} parent=1 // pred_check_branch
      %40 = sbr.rel (0) target = $region29
    $region28: #{mcvae_retina_forward.8} parent=1 // pred_region
      _
    $region29: #{mcvae_retina_forward.8} parent=1 // pred_fallthru
      _
    // Predicated region
    $region30: #{mcvae_retina_forward.8} parent=1 // pred_check
      _
    $region31: #{mcvae_retina_forward.8} parent=1 // pred_check_branch
      %42 = sbr.rel (0) target = $region33
    $region32: #{mcvae_retina_forward.8} parent=1 // pred_region
      _
    $region33: #{mcvae_retina_forward.8} parent=1 // pred_fallthru
      _
    // Predicated region
    $region34: #{mcvae_retina_forward.8} parent=1 // pred_check
      _
    $region35: #{mcvae_retina_forward.8} parent=1 // pred_check_branch
      %44 = sbr.rel (0) target = $region37
    $region36: #{mcvae_retina_forward.8} parent=1 // pred_region
      _
    $region37: #{mcvae_retina_forward.8} parent=1 // pred_fallthru
      _
    // Predicated region
    $region38: #{mcvae_retina_forward.8} parent=1 // pred_check
      _
    $region39: #{mcvae_retina_forward.8} parent=1 // pred_check_branch
      %46 = sbr.rel (0) target = $region41
    $region40: #{mcvae_retina_forward.8} parent=1 // pred_region
      %47 = dma.done [#allocation4], 1024
    $region41: #{mcvae_retina_forward.8} parent=1 // pred_fallthru
      _
    %p49 = scmp.eq.s32.totalorder 0, 0
    // Predicated region
    $region42: #{mcvae_retina_forward.8} parent=1 // pred_check
      %p50 = pneg %p49
    $region43: #{mcvae_retina_forward.8} parent=1 // pred_check_branch
      %52 = sbr.rel (%p50) target = $region45
    $region44: #{mcvae_retina_forward.8} parent=1 // pred_region
      %53 = vst [vmem:[#allocation2] sm:$0xff] 0.0
    $region45: #{mcvae_retina_forward.8} parent=1 // pred_fallthru
      _
    %v54 = vld [vmem:[#allocation2] sm:$0xff]
    %v55 = vld [vmem:[%s0] sm:$0xff]
    %v56 = vld [vmem:[%s1] sm:$0xf]
    %v57 = vld [vmem:[%s1 + $0x4] sm:$0xf]
    %v58 = vld [vmem:[%s1 + $0x8] sm:$0xf]
    %v59 = vld [vmem:[%s1 + $0xc] sm:$0xf]
    %v60 = vld [vmem:[%s1 + $0x10] sm:$0xf]
    %v61 = vld [vmem:[%s1 + $0x14] sm:$0xf]
    %v62 = vld [vmem:[%s1 + $0x18] sm:$0xf]
    %v63 = vld [vmem:[%s1 + $0x1c] sm:$0xf]
    %v64 = vld [vmem:[%s1 + $0x20] sm:$0xf]
    %v65 = vld [vmem:[%s1 + $0x24] sm:$0xf]
    %v66 = vld [vmem:[%s1 + $0x28] sm:$0xf]
    %v67 = vld [vmem:[%s1 + $0x2c] sm:$0xf]
    %v68 = vld [vmem:[%s1 + $0x30] sm:$0xf]
    %v69 = vld [vmem:[%s1 + $0x34] sm:$0xf]
    %v70 = vld [vmem:[%s1 + $0x38] sm:$0xf]
    %v71 = vld [vmem:[%s1 + $0x3c] sm:$0xf]
    %v72 = vld [vmem:[%s1 + $0x40] sm:$0xf]
    %v73 = vld [vmem:[%s1 + $0x44] sm:$0xf]
    %v74 = vld [vmem:[%s1 + $0x48] sm:$0xf]
    %v75 = vld [vmem:[%s1 + $0x4c] sm:$0xf]
    %v76 = vld [vmem:[%s1 + $0x50] sm:$0xf]
    %v77 = vld [vmem:[%s1 + $0x54] sm:$0xf]
    %v78 = vld [vmem:[%s1 + $0x58] sm:$0xf]
    %v79 = vld [vmem:[%s1 + $0x5c] sm:$0xf]
    %v80 = vld [vmem:[%s1 + $0x60] sm:$0xf]
    %v81 = vld [vmem:[%s1 + $0x64] sm:$0xf]
    %v82 = vld [vmem:[%s1 + $0x68] sm:$0xf]
    %v83 = vld [vmem:[%s1 + $0x6c] sm:$0xf]
    %v84 = vld [vmem:[%s1 + $0x70] sm:$0xf]
    %v85 = vld [vmem:[%s1 + $0x74] sm:$0xf]
    %v86 = vld [vmem:[%s1 + $0x78] sm:$0xf]
    %v87 = vld [vmem:[%s1 + $0x7c] sm:$0xf]
    %v89 = vunpack.c.l.b16 %v55
    %v90 = vunpack.c.h.b16 %v55
    %v91 = vpack.c.b16 %v89, %v89
    %v92 = vpack.c.b16 %v90, %v90
    %v127 = vunpack.c.l.b16 %v56
    %v128 = vunpack.c.l.b16 %v57
    %v129 = vunpack.c.l.b16 %v58
    %v130 = vunpack.c.l.b16 %v59
    %v131 = vunpack.c.l.b16 %v60
    %v132 = vunpack.c.l.b16 %v61
    %v133 = vunpack.c.l.b16 %v62
    %v134 = vunpack.c.l.b16 %v63
    %v135 = vunpack.c.l.b16 %v64
    %v136 = vunpack.c.l.b16 %v65
    %v137 = vunpack.c.l.b16 %v66
    %v138 = vunpack.c.l.b16 %v67
    %v139 = vunpack.c.l.b16 %v68
    %v140 = vunpack.c.l.b16 %v69
    %v141 = vunpack.c.l.b16 %v70
    %v142 = vunpack.c.l.b16 %v71
    %v143 = vunpack.c.l.b16 %v72
    %v144 = vunpack.c.l.b16 %v73
    %v145 = vunpack.c.l.b16 %v74
    %v146 = vunpack.c.l.b16 %v75
    %v147 = vunpack.c.l.b16 %v76
    %v148 = vunpack.c.l.b16 %v77
    %v149 = vunpack.c.l.b16 %v78
    %v150 = vunpack.c.l.b16 %v79
    %v151 = vunpack.c.l.b16 %v80
    %v152 = vunpack.c.l.b16 %v81
    %v153 = vunpack.c.l.b16 %v82
    %v154 = vunpack.c.l.b16 %v83
    %v155 = vunpack.c.l.b16 %v84
    %v156 = vunpack.c.l.b16 %v85
    %v157 = vunpack.c.l.b16 %v86
    %v158 = vunpack.c.l.b16 %v87
    %v159 = vpack.c.b16 %v128, %v127
    %v160 = vpack.c.b16 %v130, %v129
    %v161 = vpack.c.b16 %v132, %v131
    %v162 = vpack.c.b16 %v134, %v133
    %v163 = vpack.c.b16 %v136, %v135
    %v164 = vpack.c.b16 %v138, %v137
    %v165 = vpack.c.b16 %v140, %v139
    %v166 = vpack.c.b16 %v142, %v141
    %v167 = vpack.c.b16 %v144, %v143
    %v168 = vpack.c.b16 %v146, %v145
    %v169 = vpack.c.b16 %v148, %v147
    %v170 = vpack.c.b16 %v150, %v149
    %v171 = vpack.c.b16 %v152, %v151
    %v172 = vpack.c.b16 %v154, %v153
    %v173 = vpack.c.b16 %v156, %v155
    %v174 = vpack.c.b16 %v158, %v157
    %191 = vmatprep.subr.bf16.mxu0 0
    %192 = vmatpush1.bf16.msra.mxu0 %v166
    %193 = vmatprep.subr.bf16.mxu0 0
    %194 = vmatpush1.bf16.msra.mxu0 %v165
    %195 = vmatprep.subr.bf16.mxu0 0
    %196 = vmatpush1.bf16.msra.mxu0 %v164
    %197 = vmatprep.subr.bf16.mxu0 0
    %198 = vmatpush1.bf16.msra.mxu0 %v163
    %199 = vmatprep.subr.bf16.mxu0 0
    %200 = vmatpush1.bf16.msra.mxu0 %v162
    %201 = vmatprep.subr.bf16.mxu0 0
    %202 = vmatpush1.bf16.msra.mxu0 %v161
    %203 = vmatprep.subr.bf16.mxu0 0
    %204 = vmatpush1.bf16.msra.mxu0 %v160
    %205 = vmatprep.subr.bf16.mxu0 0
    %206 = vmatpush1.bf16.msra.mxu0 %v159
    %207 = vmatprep.subr.bf16.mxu0 0
    %208 = vmatpush2.bf16.msra.mxu0 %v174
    %209 = vmatprep.subr.bf16.mxu0 0
    %210 = vmatpush2.bf16.msra.mxu0 %v173
    %211 = vmatprep.subr.bf16.mxu0 0
    %212 = vmatpush2.bf16.msra.mxu0 %v172
    %213 = vmatprep.subr.bf16.mxu0 0
    %214 = vmatpush2.bf16.msra.mxu0 %v171
    %215 = vmatprep.subr.bf16.mxu0 0
    %216 = vmatpush2.bf16.msra.mxu0 %v170
    %217 = vmatprep.subr.bf16.mxu0 0
    %218 = vmatpush2.bf16.msra.mxu0 %v169
    %219 = vmatprep.subr.bf16.mxu0 0
    %220 = vmatpush2.bf16.msra.mxu0 %v168
    %221 = vmatprep.subr.bf16.mxu0 0
    %222 = vmatpush2.bf16.msra.mxu0 %v167
    %223 = vmatprep.mubr.bf16.mxu0 %v92
    %224 = vmatmul.mubr.bf16.gmra.mxu0 %v91
    %v225 = vpop.f32.mrf.mxu0
    %v226 = vadd.f32 0.0, %v225
    %v227 = vpop.f32.mrf.mxu0
    %v228 = vpop.f32.mrf.mxu0
    %v229 = vpop.f32.mrf.mxu0
    %230 = vdwg.mxu0
    %v231 = vadd.f32 %v54, %v226
    %232 = vst [vmem:[#allocation2] sm:$0xff] %v231
    // Predicated region
    $region46: #{mcvae_retina_forward.8} parent=1 // pred_check
      %p233 = pneg %p49
    $region47: #{mcvae_retina_forward.8} parent=1 // pred_check_branch
      %235 = sbr.rel (%p233) target = $region49
    $region48: #{mcvae_retina_forward.8} parent=1 // pred_region
      %v236 = vld [vmem:[#allocation2] sm:$0xff]
      %v237 = vld [vmem:[%s2] sm:$0x1]
      %v239 = vlaneseq
      %v240 = vshrl.u32 %v239, 7
      %v241 = vsub.s32 0, %v240
      %v242 = vrot.slane %v237, %v241
      %v244 = vadd.f32 %v236, %v242
      %v245 = vmax.f32 %v244, 0.0
      %v246 = vpack.c.bf16 %v245, %v245
      %v247 = vld [vmem:[%s3] sm:$0xff]
      %v248 = vld [vmem:[%s3 + $0x8] sm:$0xff]
      %v249 = vld [vmem:[%s3 + $0x10] sm:$0xff]
      %v250 = vld [vmem:[%s3 + $0x18] sm:$0xff]
      %v251 = vld [vmem:[%s3 + $0x20] sm:$0xff]
      %v252 = vld [vmem:[%s3 + $0x28] sm:$0xff]
      %v253 = vld [vmem:[%s3 + $0x30] sm:$0xff]
      %v254 = vld [vmem:[%s3 + $0x38] sm:$0xff]
      %v255 = vld [vmem:[%s3 + $0x40] sm:$0xff]
      %v256 = vld [vmem:[%s3 + $0x48] sm:$0xff]
      %v257 = vld [vmem:[%s3 + $0x50] sm:$0xff]
      %v258 = vld [vmem:[%s3 + $0x58] sm:$0xff]
      %v259 = vld [vmem:[%s3 + $0x60] sm:$0xff]
      %v260 = vld [vmem:[%s3 + $0x68] sm:$0xff]
      %v261 = vld [vmem:[%s3 + $0x70] sm:$0xff]
      %v262 = vld [vmem:[%s3 + $0x78] sm:$0xff]
      %v263 = vld [vmem:[%s4] sm:$0x3]
      %v265 = vlaneseq
      %v266 = vshrl.u32 %v265, 7
      %v267 = vsub.s32 0, %v266
      %v268 = vrot.slane %v263, %v267
      %v269 = vlaneseq
      %v270 = vshrl.u32 %v269, 7
      %v271 = vsub.s32 1, %v270
      %v272 = vrot.slane %v263, %v271
      %v291 = vunpack.c.l.b16 %v247
      %v292 = vunpack.c.h.b16 %v247
      %v293 = vunpack.c.l.b16 %v248
      %v294 = vunpack.c.h.b16 %v248
      %v295 = vunpack.c.l.b16 %v249
      %v296 = vunpack.c.h.b16 %v249
      %v297 = vunpack.c.l.b16 %v250
      %v298 = vunpack.c.h.b16 %v250
      %v299 = vunpack.c.l.b16 %v251
      %v300 = vunpack.c.h.b16 %v251
      %v301 = vunpack.c.l.b16 %v252
      %v302 = vunpack.c.h.b16 %v252
      %v303 = vunpack.c.l.b16 %v253
      %v304 = vunpack.c.h.b16 %v253
      %v305 = vunpack.c.l.b16 %v254
      %v306 = vunpack.c.h.b16 %v254
      %v307 = vunpack.c.l.b16 %v255
      %v308 = vunpack.c.h.b16 %v255
      %v309 = vunpack.c.l.b16 %v256
      %v310 = vunpack.c.h.b16 %v256
      %v311 = vunpack.c.l.b16 %v257
      %v312 = vunpack.c.h.b16 %v257
      %v313 = vunpack.c.l.b16 %v258
      %v314 = vunpack.c.h.b16 %v258
      %v315 = vunpack.c.l.b16 %v259
      %v316 = vunpack.c.h.b16 %v259
      %v317 = vunpack.c.l.b16 %v260
      %v318 = vunpack.c.h.b16 %v260
      %v319 = vunpack.c.l.b16 %v261
      %v320 = vunpack.c.h.b16 %v261
      %v321 = vunpack.c.l.b16 %v262
      %v322 = vunpack.c.h.b16 %v262
      %v323 = vpack.c.b16 %v293, %v291
      %v324 = vpack.c.b16 %v294, %v292
      %v325 = vpack.c.b16 %v297, %v295
      %v326 = vpack.c.b16 %v298, %v296
      %v327 = vpack.c.b16 %v301, %v299
      %v328 = vpack.c.b16 %v302, %v300
      %v329 = vpack.c.b16 %v305, %v303
      %v330 = vpack.c.b16 %v306, %v304
      %v331 = vpack.c.b16 %v309, %v307
      %v332 = vpack.c.b16 %v310, %v308
      %v333 = vpack.c.b16 %v313, %v311
      %v334 = vpack.c.b16 %v314, %v312
      %v335 = vpack.c.b16 %v317, %v315
      %v336 = vpack.c.b16 %v318, %v316
      %v337 = vpack.c.b16 %v321, %v319
      %v338 = vpack.c.b16 %v322, %v320
      %355 = vmatprep.subr.bf16.mxu0 %v338
      %356 = vmatpush1.bf16.msra.mxu0 %v337
      %357 = vmatprep.subr.bf16.mxu0 %v336
      %358 = vmatpush1.bf16.msra.mxu0 %v335
      %359 = vmatprep.subr.bf16.mxu0 %v334
      %360 = vmatpush1.bf16.msra.mxu0 %v333
      %361 = vmatprep.subr.bf16.mxu0 %v332
      %362 = vmatpush1.bf16.msra.mxu0 %v331
      %363 = vmatprep.subr.bf16.mxu0 %v330
      %364 = vmatpush1.bf16.msra.mxu0 %v329
      %365 = vmatprep.subr.bf16.mxu0 %v328
      %366 = vmatpush1.bf16.msra.mxu0 %v327
      %367 = vmatprep.subr.bf16.mxu0 %v326
      %368 = vmatpush1.bf16.msra.mxu0 %v325
      %369 = vmatprep.subr.bf16.mxu0 %v324
      %370 = vmatpush1.bf16.msra.mxu0 %v323
      %371 = vmatprep.subr.bf16.mxu0 0
      %372 = vmatpush2.bf16.msra.mxu0 0
      %373 = vmatprep.subr.bf16.mxu0 0
      %374 = vmatpush2.bf16.msra.mxu0 0
      %375 = vmatprep.subr.bf16.mxu0 0
      %376 = vmatpush2.bf16.msra.mxu0 0
      %377 = vmatprep.subr.bf16.mxu0 0
      %378 = vmatpush2.bf16.msra.mxu0 0
      %379 = vmatprep.subr.bf16.mxu0 0
      %380 = vmatpush2.bf16.msra.mxu0 0
      %381 = vmatprep.subr.bf16.mxu0 0
      %382 = vmatpush2.bf16.msra.mxu0 0
      %383 = vmatprep.subr.bf16.mxu0 0
      %384 = vmatpush2.bf16.msra.mxu0 0
      %385 = vmatprep.subr.bf16.mxu0 0
      %386 = vmatpush2.bf16.msra.mxu0 0
      %387 = vmatprep.mubr.bf16.mxu0 0
      %388 = vmatmul.mubr.bf16.gmra.mxu0 %v246
      %v389 = vpop.f32.mrf.mxu0
      %v390 = vadd.f32 %v268, %v389
      %v391 = vpop.f32.mrf.mxu0
      %v392 = vadd.f32 %v272, %v391
      %v393 = vpop.f32.mrf.mxu0
      %v394 = vpop.f32.mrf.mxu0
      %395 = vdwg.mxu0
      %v396 = vmul.f32 %v392, 0.5
      %v397 = vmul.f32 %v396, 1.442695
      %v398 = vpow.pop %v397
      %v399 = vld [vmem:[%s7] sm:$0xff]
      %v400 = vmul.f32 %v399, %v398
      %v401 = vadd.f32 %v390, %v400
      %v402 = vld [vmem:[%s8] sm:$0xff]
      %v403 = vmul.f32 %v402, %v398
      %v404 = vadd.f32 %v390, %v403
      %v405 = vpack.c.bf16 %v404, %v404
      %v406 = vld [vmem:[#allocation3] sm:$0xf]
      %v407 = vld [vmem:[#allocation3 + $0x4] sm:$0xf]
      %v408 = vld [vmem:[#allocation3 + $0x8] sm:$0xf]
      %v409 = vld [vmem:[#allocation3 + $0xc] sm:$0xf]
      %v410 = vld [vmem:[#allocation3 + $0x10] sm:$0xf]
      %v411 = vld [vmem:[#allocation3 + $0x14] sm:$0xf]
      %v412 = vld [vmem:[#allocation3 + $0x18] sm:$0xf]
      %v413 = vld [vmem:[#allocation3 + $0x1c] sm:$0xf]
      %v414 = vld [vmem:[#allocation3 + $0x20] sm:$0xf]
      %v415 = vld [vmem:[#allocation3 + $0x24] sm:$0xf]
      %v416 = vld [vmem:[#allocation3 + $0x28] sm:$0xf]
      %v417 = vld [vmem:[#allocation3 + $0x2c] sm:$0xf]
      %v418 = vld [vmem:[#allocation3 + $0x30] sm:$0xf]
      %v419 = vld [vmem:[#allocation3 + $0x34] sm:$0xf]
      %v420 = vld [vmem:[#allocation3 + $0x38] sm:$0xf]
      %v421 = vld [vmem:[#allocation3 + $0x3c] sm:$0xf]
      %v422 = vld [vmem:[%s6] sm:$0x1]
      %v424 = vlaneseq
      %v425 = vshrl.u32 %v424, 7
      %v426 = vsub.s32 0, %v425
      %v427 = vrot.slane %v422, %v426
      %v445 = vunpack.c.l.b16 %v406
      %v446 = vunpack.c.l.b16 %v407
      %v447 = vunpack.c.l.b16 %v408
      %v448 = vunpack.c.l.b16 %v409
      %v449 = vunpack.c.l.b16 %v410
      %v450 = vunpack.c.l.b16 %v411
      %v451 = vunpack.c.l.b16 %v412
      %v452 = vunpack.c.l.b16 %v413
      %v453 = vunpack.c.l.b16 %v414
      %v454 = vunpack.c.l.b16 %v415
      %v455 = vunpack.c.l.b16 %v416
      %v456 = vunpack.c.l.b16 %v417
      %v457 = vunpack.c.l.b16 %v418
      %v458 = vunpack.c.l.b16 %v419
      %v459 = vunpack.c.l.b16 %v420
      %v460 = vunpack.c.l.b16 %v421
      %v461 = vpack.c.b16 %v446, %v445
      %v462 = vpack.c.b16 %v448, %v447
      %v463 = vpack.c.b16 %v450, %v449
      %v464 = vpack.c.b16 %v452, %v451
      %v465 = vpack.c.b16 %v454, %v453
      %v466 = vpack.c.b16 %v456, %v455
      %v467 = vpack.c.b16 %v458, %v457
      %v468 = vpack.c.b16 %v460, %v459
      %477 = vmatprep.subr.bf16.mxu0 0
      %478 = vmatpush1.bf16.msra.mxu0 %v468
      %479 = vmatprep.subr.bf16.mxu0 0
      %480 = vmatpush1.bf16.msra.mxu0 %v467
      %481 = vmatprep.subr.bf16.mxu0 0
      %482 = vmatpush1.bf16.msra.mxu0 %v466
      %483 = vmatprep.subr.bf16.mxu0 0
      %484 = vmatpush1.bf16.msra.mxu0 %v465
      %485 = vmatprep.subr.bf16.mxu0 0
      %486 = vmatpush1.bf16.msra.mxu0 %v464
      %487 = vmatprep.subr.bf16.mxu0 0
      %488 = vmatpush1.bf16.msra.mxu0 %v463
      %489 = vmatprep.subr.bf16.mxu0 0
      %490 = vmatpush1.bf16.msra.mxu0 %v462
      %491 = vmatprep.subr.bf16.mxu0 0
      %492 = vmatpush1.bf16.msra.mxu0 %v461
      %493 = vmatprep.subr.bf16.mxu0 0
      %494 = vmatpush2.bf16.msra.mxu0 0
      %495 = vmatprep.subr.bf16.mxu0 0
      %496 = vmatpush2.bf16.msra.mxu0 0
      %497 = vmatprep.subr.bf16.mxu0 0
      %498 = vmatpush2.bf16.msra.mxu0 0
      %499 = vmatprep.subr.bf16.mxu0 0
      %500 = vmatpush2.bf16.msra.mxu0 0
      %501 = vmatprep.subr.bf16.mxu0 0
      %502 = vmatpush2.bf16.msra.mxu0 0
      %503 = vmatprep.subr.bf16.mxu0 0
      %504 = vmatpush2.bf16.msra.mxu0 0
      %505 = vmatprep.subr.bf16.mxu0 0
      %506 = vmatpush2.bf16.msra.mxu0 0
      %507 = vmatprep.subr.bf16.mxu0 0
      %508 = vmatpush2.bf16.msra.mxu0 0
      %509 = vmatprep.mubr.bf16.mxu0 0
      %510 = vmatmul.mubr.bf16.gmra.mxu0 %v405
      %v511 = vpop.f32.mrf.mxu0
      %v512 = vadd.f32 %v427, %v511
      %v513 = vpop.f32.mrf.mxu0
      %v514 = vpop.f32.mrf.mxu0
      %v515 = vpop.f32.mrf.mxu0
      %516 = vdwg.mxu0
      %v517 = vmax.f32 %v512, 0.0
      %518 = vst [vmem:[%s9] sm:$0xff] %v401
      %519 = vst [vmem:[%s9 + $0x8] sm:$0xff] %v390
      %520 = vst [vmem:[%s9 + $0x10] sm:$0xff] %v392
      %v521 = vpack.c.bf16 %v517, %v517
      %522 = vst [vmem:[%s10] sm:$0xf] %v521
    $region49: #{mcvae_retina_forward.8} parent=1 // pred_fallthru
      _
    // Predicated region
    $region50: #{mcvae_retina_forward.8} parent=1 // pred_check
      _
    $region51: #{mcvae_retina_forward.8} parent=1 // pred_check_branch
      %524 = sbr.rel (0) target = $region53
    $region52: #{mcvae_retina_forward.8} parent=1 // pred_region
      _
    $region53: #{mcvae_retina_forward.8} parent=1 // pred_fallthru
      _
    // Predicated region
    $region54: #{mcvae_retina_forward.8} parent=1 // pred_check
      _
    $region55: #{mcvae_retina_forward.8} parent=1 // pred_check_branch
      %526 = sbr.rel (0) target = $region57
    $region56: #{mcvae_retina_forward.8} parent=1 // pred_region
      _
    $region57: #{mcvae_retina_forward.8} parent=1 // pred_fallthru
      _
    // Predicated region
    $region58: #{mcvae_retina_forward.8} parent=1 // pred_check
      _
    $region59: #{mcvae_retina_forward.8} parent=1 // pred_check_branch
      %528 = sbr.rel (0) target = $region61
    $region60: #{mcvae_retina_forward.8} parent=1 // pred_region
      _
    $region61: #{mcvae_retina_forward.8} parent=1 // pred_fallthru
      _
    // Predicated region
    $region62: #{mcvae_retina_forward.8} parent=1 // pred_check
      _
    $region63: #{mcvae_retina_forward.8} parent=1 // pred_check_branch
      %530 = sbr.rel (0) target = $region65
    $region64: #{mcvae_retina_forward.8} parent=1 // pred_region
      _
    $region65: #{mcvae_retina_forward.8} parent=1 // pred_fallthru
      _
    %531 = vsyncpa [#allocation4], 1

// kernel: mcvae_retina_forward.6
$region0: #{mcvae_retina_forward.6}
  #allocation0 [shape = 'u32[]', space=smem, size = 0x4, offset = 0x4, fixed_abs, tag = 'smem constant byte address 0x4 - core index']
  #allocation1 [shape = 'u32[144,128]{1,0:T(1,128)}', space=vmem, size = 0x12000, scoped, tag = 'internal scratch']
  #allocation2 [shape = 'f32[8,128]{1,0:T(8,128)}', space=vmem, size = 0x1000, scoped, tag = 'scratch operand']
  %s0 = inlined_call_operand.vmem [shape: bf16[8,1024], index: 0, kind: input, shape index: {}]
  %s1 = inlined_call_operand.vmem [shape: bf16[1024,128], index: 1, kind: input, shape index: {}]
  %s2 = inlined_call_operand.vmem [shape: f32[1,128], index: 2, kind: input, shape index: {}]
  %s3 = inlined_call_operand.vmem [shape: bf16[128,256], index: 3, kind: input, shape index: {}]
  %s4 = inlined_call_operand.vmem [shape: f32[1,256], index: 4, kind: input, shape index: {}]
  %s5 = inlined_call_operand.hbm [shape: bf16[128,128], index: 5, kind: input, shape index: {}]
  %s6 = inlined_call_operand.vmem [shape: f32[1,128], index: 6, kind: input, shape index: {}]
  %s7 = inlined_call_operand.vmem [shape: f32[8,128], index: 7, kind: input, shape index: {}]
  %s8 = inlined_call_operand.vmem [shape: f32[8,128], index: 8, kind: input, shape index: {}]
  %s9 = inlined_call_operand.vmem [shape: f32[8,384], index: 9, kind: output, shape index: {0}]
  %s10 = inlined_call_operand.vmem [shape: bf16[8,128], index: 10, kind: output, shape index: {1}]
  %11 = xla_tuple %s9, %s10
  %s12 = sld [smem:[#allocation0]]
  $region89: #{mcvae_retina_forward.6} parent=0
    _
  %s14 = ssub.s32 1, %s12
  %s15 = scalar_select 0, %s14, %s12
  $region1: #{mcvae_retina_forward.6} parent=0
    #allocation3 [shape = 'u8[32768]{0}', space=vmem, size = 0x8000, scoped, tag = 'input window, operand 5, single buffered']
    #allocation4 [shape = 's32[2]{0}', space=sflag, size = 0x8, scoped, tag = 'scoped memory for mcvae_retina_forward.6']
    %16 = vsyncpa [#allocation4], 0
    loop: start=0, step=1, limit=4
    $region2: #{mcvae_retina_forward.6} parent=1 // loop_pre_header
      _
    $region3: #{mcvae_retina_forward.6} parent=1 // loop_header
      %s18 = sphi 0, %s22
      %p19 = scmp.ge.s32.totalorder %s18, 4
      %s28 = sphi 0, %s30
      %s31 = sphi 0, %s28
      %s32 = sphi 0, %s31
      %s48 = sphi 0, %s32
      %s54 = sphi 0, %s56
      %s57 = sphi 0, %s54
      %s58 = sphi 0, %s57
      %s74 = sphi 0, %s58
      %s78 = sphi 0, %s78
      %s80 = sphi 0, %s78
      %s81 = sphi 0, %s80
      %s95 = sphi 0, %s81
      %s99 = sphi 0, %s99
      %s101 = sphi 0, %s99
      %s102 = sphi 0, %s101
      %s116 = sphi 0, %s102
      %s120 = sphi 0, %s120
      %s122 = sphi 0, %s120
      %s123 = sphi 0, %s122
      %s137 = sphi 0, %s123
      %s141 = sphi 0, %s141
      %s143 = sphi 0, %s141
      %s144 = sphi 0, %s143
      %s158 = sphi 0, %s144
      %s162 = sphi 0, %s162
      %s164 = sphi 0, %s162
      %s165 = sphi 0, %s164
      %s179 = sphi 0, %s165
      %s183 = sphi 0, %s183
      %s185 = sphi 0, %s183
      %s186 = sphi 0, %s185
      %s200 = sphi 0, %s186
      %s204 = sphi 0, %s204
      %s206 = sphi 0, %s204
      %s207 = sphi 0, %s206
      %s221 = sphi 0, %s207
      %s225 = sphi 0, %s225
      %s227 = sphi 0, %s225
      %s228 = sphi 0, %s227
      %s242 = sphi 0, %s228
      %s246 = sphi 0, %s246
      %s248 = sphi 0, %s246
      %s249 = sphi 0, %s248
      %s263 = sphi 0, %s249
    $region4: #{mcvae_retina_forward.6} parent=1 // loop_header_branch
      %21 = sbr.rel (%p19) target = $region8
    $region5: #{mcvae_retina_forward.6} parent=1 // loop_body
      %s23 = ssub.s32 %s18, 1
      %s24 = ssub.s32 %s18, 2
      %s25 = sadd.s32 %s18, 1
      %s26 = ssub.s32 %s18, %s25
      %p27 = scmp.eq.s32.totalorder %s26, 0
      %s29 = sadd.s32 %s28, 1
      %s30 = scalar_select %p27, %s28, %s29
      %p33 = pneg %p27
      %p34 = scmp.eq.s32.totalorder %s18, 1
      %p35 = por %p33, %p34
      %p36 = scmp.ne.s32.totalorder %s28, %s31
      %p37 = scmp.eq.s32.totalorder %s18, 0
      %p38 = por %p36, %p37
      %p39 = scmp.ne.s32.totalorder %s28, %s31
      %p40 = scmp.eq.s32.totalorder %s23, 1
      %p41 = por %p39, %p40
      %p42 = scmp.ne.s32.totalorder %s31, %s32
      %p43 = scmp.eq.s32.totalorder %s23, 0
      %p44 = por %p42, %p43
      %p45 = scmp.ne.s32.totalorder %s31, %s32
      %p46 = scmp.eq.s32.totalorder %s24, 1
      %p47 = por %p45, %p46
      %p49 = scmp.ne.s32.totalorder %s32, %s48
      %p50 = scmp.eq.s32.totalorder %s24, 0
      %p51 = por %p49, %p50
      %s52 = ssub.s32 %s18, %s25
      %p53 = scmp.eq.s32.totalorder %s52, 0
      %s55 = sadd.s32 %s54, 1
      %s56 = scalar_select %p53, %s54, %s55
      %p59 = pneg %p53
      %p60 = scmp.eq.s32.totalorder %s18, 1
      %p61 = por %p59, %p60
      %p62 = scmp.ne.s32.totalorder %s54, %s57
      %p63 = scmp.eq.s32.totalorder %s18, 0
      %p64 = por %p62, %p63
      %p65 = scmp.ne.s32.totalorder %s54, %s57
      %p66 = scmp.eq.s32.totalorder %s23, 1
      %p67 = por %p65, %p66
      %p68 = scmp.ne.s32.totalorder %s57, %s58
      %p69 = scmp.eq.s32.totalorder %s23, 0
      %p70 = por %p68, %p69
      %p71 = scmp.ne.s32.totalorder %s57, %s58
      %p72 = scmp.eq.s32.totalorder %s24, 1
      %p73 = por %p71, %p72
      %p75 = scmp.ne.s32.totalorder %s58, %s74
      %p76 = scmp.eq.s32.totalorder %s24, 0
      %p77 = por %p75, %p76
      %s79 = sadd.s32 %s78, 1
      %p82 = scmp.eq.s32.totalorder %s18, 1
      %p83 = scmp.ne.s32.totalorder %s78, %s80
      %p84 = scmp.eq.s32.totalorder %s18, 0
      %p85 = por %p83, %p84
      %p86 = scmp.ne.s32.totalorder %s78, %s80
      %p87 = scmp.eq.s32.totalorder %s23, 1
      %p88 = por %p86, %p87
      %p89 = scmp.ne.s32.totalorder %s80, %s81
      %p90 = scmp.eq.s32.totalorder %s23, 0
      %p91 = por %p89, %p90
      %p92 = scmp.ne.s32.totalorder %s80, %s81
      %p93 = scmp.eq.s32.totalorder %s24, 1
      %p94 = por %p92, %p93
      %p96 = scmp.ne.s32.totalorder %s81, %s95
      %p97 = scmp.eq.s32.totalorder %s24, 0
      %p98 = por %p96, %p97
      %s100 = sadd.s32 %s99, 1
      %p103 = scmp.eq.s32.totalorder %s18, 1
      %p104 = scmp.ne.s32.totalorder %s99, %s101
      %p105 = scmp.eq.s32.totalorder %s18, 0
      %p106 = por %p104, %p105
      %p107 = scmp.ne.s32.totalorder %s99, %s101
      %p108 = scmp.eq.s32.totalorder %s23, 1
      %p109 = por %p107, %p108
      %p110 = scmp.ne.s32.totalorder %s101, %s102
      %p111 = scmp.eq.s32.totalorder %s23, 0
      %p112 = por %p110, %p111
      %p113 = scmp.ne.s32.totalorder %s101, %s102
      %p114 = scmp.eq.s32.totalorder %s24, 1
      %p115 = por %p113, %p114
      %p117 = scmp.ne.s32.totalorder %s102, %s116
      %p118 = scmp.eq.s32.totalorder %s24, 0
      %p119 = por %p117, %p118
      %s121 = sadd.s32 %s120, 1
      %p124 = scmp.eq.s32.totalorder %s18, 1
      %p125 = scmp.ne.s32.totalorder %s120, %s122
      %p126 = scmp.eq.s32.totalorder %s18, 0
      %p127 = por %p125, %p126
      %p128 = scmp.ne.s32.totalorder %s120, %s122
      %p129 = scmp.eq.s32.totalorder %s23, 1
      %p130 = por %p128, %p129
      %p131 = scmp.ne.s32.totalorder %s122, %s123
      %p132 = scmp.eq.s32.totalorder %s23, 0
      %p133 = por %p131, %p132
      %p134 = scmp.ne.s32.totalorder %s122, %s123
      %p135 = scmp.eq.s32.totalorder %s24, 1
      %p136 = por %p134, %p135
      %p138 = scmp.ne.s32.totalorder %s123, %s137
      %p139 = scmp.eq.s32.totalorder %s24, 0
      %p140 = por %p138, %p139
      %s142 = sadd.s32 %s141, 1
      %p145 = scmp.eq.s32.totalorder %s18, 1
      %p146 = scmp.ne.s32.totalorder %s141, %s143
      %p147 = scmp.eq.s32.totalorder %s18, 0
      %p148 = por %p146, %p147
      %p149 = scmp.ne.s32.totalorder %s141, %s143
      %p150 = scmp.eq.s32.totalorder %s23, 1
      %p151 = por %p149, %p150
      %p152 = scmp.ne.s32.totalorder %s143, %s144
      %p153 = scmp.eq.s32.totalorder %s23, 0
      %p154 = por %p152, %p153
      %p155 = scmp.ne.s32.totalorder %s143, %s144
      %p156 = scmp.eq.s32.totalorder %s24, 1
      %p157 = por %p155, %p156
      %p159 = scmp.ne.s32.totalorder %s144, %s158
      %p160 = scmp.eq.s32.totalorder %s24, 0
      %p161 = por %p159, %p160
      %s163 = sadd.s32 %s162, 1
      %p166 = scmp.eq.s32.totalorder %s18, 1
      %p167 = scmp.ne.s32.totalorder %s162, %s164
      %p168 = scmp.eq.s32.totalorder %s18, 0
      %p169 = por %p167, %p168
      %p170 = scmp.ne.s32.totalorder %s162, %s164
      %p171 = scmp.eq.s32.totalorder %s23, 1
      %p172 = por %p170, %p171
      %p173 = scmp.ne.s32.totalorder %s164, %s165
      %p174 = scmp.eq.s32.totalorder %s23, 0
      %p175 = por %p173, %p174
      %p176 = scmp.ne.s32.totalorder %s164, %s165
      %p177 = scmp.eq.s32.totalorder %s24, 1
      %p178 = por %p176, %p177
      %p180 = scmp.ne.s32.totalorder %s165, %s179
      %p181 = scmp.eq.s32.totalorder %s24, 0
      %p182 = por %p180, %p181
      %s184 = sadd.s32 %s183, 1
      %p187 = scmp.eq.s32.totalorder %s18, 1
      %p188 = scmp.ne.s32.totalorder %s183, %s185
      %p189 = scmp.eq.s32.totalorder %s18, 0
      %p190 = por %p188, %p189
      %p191 = scmp.ne.s32.totalorder %s183, %s185
      %p192 = scmp.eq.s32.totalorder %s23, 1
      %p193 = por %p191, %p192
      %p194 = scmp.ne.s32.totalorder %s185, %s186
      %p195 = scmp.eq.s32.totalorder %s23, 0
      %p196 = por %p194, %p195
      %p197 = scmp.ne.s32.totalorder %s185, %s186
      %p198 = scmp.eq.s32.totalorder %s24, 1
      %p199 = por %p197, %p198
      %p201 = scmp.ne.s32.totalorder %s186, %s200
      %p202 = scmp.eq.s32.totalorder %s24, 0
      %p203 = por %p201, %p202
      %s205 = sadd.s32 %s204, 1
      %p208 = scmp.eq.s32.totalorder %s18, 1
      %p209 = scmp.ne.s32.totalorder %s204, %s206
      %p210 = scmp.eq.s32.totalorder %s18, 0
      %p211 = por %p209, %p210
      %p212 = scmp.ne.s32.totalorder %s204, %s206
      %p213 = scmp.eq.s32.totalorder %s23, 1
      %p214 = por %p212, %p213
      %p215 = scmp.ne.s32.totalorder %s206, %s207
      %p216 = scmp.eq.s32.totalorder %s23, 0
      %p217 = por %p215, %p216
      %p218 = scmp.ne.s32.totalorder %s206, %s207
      %p219 = scmp.eq.s32.totalorder %s24, 1
      %p220 = por %p218, %p219
      %p222 = scmp.ne.s32.totalorder %s207, %s221
      %p223 = scmp.eq.s32.totalorder %s24, 0
      %p224 = por %p222, %p223
      %s226 = sadd.s32 %s225, 1
      %p229 = scmp.eq.s32.totalorder %s18, 1
      %p230 = scmp.ne.s32.totalorder %s225, %s227
      %p231 = scmp.eq.s32.totalorder %s18, 0
      %p232 = por %p230, %p231
      %p233 = scmp.ne.s32.totalorder %s225, %s227
      %p234 = scmp.eq.s32.totalorder %s23, 1
      %p235 = por %p233, %p234
      %p236 = scmp.ne.s32.totalorder %s227, %s228
      %p237 = scmp.eq.s32.totalorder %s23, 0
      %p238 = por %p236, %p237
      %p239 = scmp.ne.s32.totalorder %s227, %s228
      %p240 = scmp.eq.s32.totalorder %s24, 1
      %p241 = por %p239, %p240
      %p243 = scmp.ne.s32.totalorder %s228, %s242
      %p244 = scmp.eq.s32.totalorder %s24, 0
      %p245 = por %p243, %p244
      %s247 = sadd.s32 %s246, 1
      %p250 = scmp.eq.s32.totalorder %s18, 1
      %p251 = scmp.ne.s32.totalorder %s246, %s248
      %p252 = scmp.eq.s32.totalorder %s18, 0
      %p253 = por %p251, %p252
      %p254 = scmp.ne.s32.totalorder %s246, %s248
      %p255 = scmp.eq.s32.totalorder %s23, 1
      %p256 = por %p254, %p255
      %p257 = scmp.ne.s32.totalorder %s248, %s249
      %p258 = scmp.eq.s32.totalorder %s23, 0
      %p259 = por %p257, %p258
      %p260 = scmp.ne.s32.totalorder %s248, %s249
      %p261 = scmp.eq.s32.totalorder %s24, 1
      %p262 = por %p260, %p261
      %p264 = scmp.ne.s32.totalorder %s249, %s263
      %p265 = scmp.eq.s32.totalorder %s24, 0
      %p266 = por %p264, %p265
      %p267 = scmp.le.s32.totalorder 1, %s18
      %p268 = scmp.lt.s32.totalorder %s18, 3
      %p269 = pnand %p267, %p268
      %p270 = pneg %p269
      // Predicated region
      $region9: #{mcvae_retina_forward.6} parent=5 // pred_check
        _
      $region10: #{mcvae_retina_forward.6} parent=5 // pred_check_branch
        %272 = sbr.rel (%p269) target = $region12
      $region11: #{mcvae_retina_forward.6} parent=5 // pred_region
        %s273 = ssub.s32 %s18, 1
        // Predicated region
        $region13: #{mcvae_retina_forward.6} parent=11 // pred_check
          %p274 = pneg %p91
        $region14: #{mcvae_retina_forward.6} parent=11 // pred_check_branch
          %276 = sbr.rel (%p274) target = $region16
        $region15: #{mcvae_retina_forward.6} parent=11 // pred_region
          _
        $region16: #{mcvae_retina_forward.6} parent=11 // pred_fallthru
          _
        // Predicated region
        $region17: #{mcvae_retina_forward.6} parent=11 // pred_check
          %p277 = pneg %p112
        $region18: #{mcvae_retina_forward.6} parent=11 // pred_check_branch
          %279 = sbr.rel (%p277) target = $region20
        $region19: #{mcvae_retina_forward.6} parent=11 // pred_region
          _
        $region20: #{mcvae_retina_forward.6} parent=11 // pred_fallthru
          _
        // Predicated region
        $region21: #{mcvae_retina_forward.6} parent=11 // pred_check
          %p280 = pneg %p133
        $region22: #{mcvae_retina_forward.6} parent=11 // pred_check_branch
          %282 = sbr.rel (%p280) target = $region24
        $region23: #{mcvae_retina_forward.6} parent=11 // pred_region
          _
        $region24: #{mcvae_retina_forward.6} parent=11 // pred_fallthru
          _
        // Predicated region
        $region25: #{mcvae_retina_forward.6} parent=11 // pred_check
          %p283 = pneg %p154
        $region26: #{mcvae_retina_forward.6} parent=11 // pred_check_branch
          %285 = sbr.rel (%p283) target = $region28
        $region27: #{mcvae_retina_forward.6} parent=11 // pred_region
          %s287 = ssub.s32 1024, 1024
          %288 = vsyncadd [#allocation4], %s287
          %s289 = sshll.u32 [#allocation3], 4
          %s290 = int_to_ptr.vmem [resolvable:$true] %s289
          %295 = dma.hbm_to_vmem [thread:$0]  %s5, 1024, %s290, [#allocation4], 64, 64, 4
        $region28: #{mcvae_retina_forward.6} parent=11 // pred_fallthru
          _
        // Predicated region
        $region29: #{mcvae_retina_forward.6} parent=11 // pred_check
          %p296 = pneg %p175
        $region30: #{mcvae_retina_forward.6} parent=11 // pred_check_branch
          %298 = sbr.rel (%p296) target = $region32
        $region31: #{mcvae_retina_forward.6} parent=11 // pred_region
          _
        $region32: #{mcvae_retina_forward.6} parent=11 // pred_fallthru
          _
        // Predicated region
        $region33: #{mcvae_retina_forward.6} parent=11 // pred_check
          %p299 = pneg %p196
        $region34: #{mcvae_retina_forward.6} parent=11 // pred_check_branch
          %301 = sbr.rel (%p299) target = $region36
        $region35: #{mcvae_retina_forward.6} parent=11 // pred_region
          _
        $region36: #{mcvae_retina_forward.6} parent=11 // pred_fallthru
          _
        // Predicated region
        $region37: #{mcvae_retina_forward.6} parent=11 // pred_check
          %p302 = pneg %p217
        $region38: #{mcvae_retina_forward.6} parent=11 // pred_check_branch
          %304 = sbr.rel (%p302) target = $region40
        $region39: #{mcvae_retina_forward.6} parent=11 // pred_region
          _
        $region40: #{mcvae_retina_forward.6} parent=11 // pred_fallthru
          _
      $region12: #{mcvae_retina_forward.6} parent=5 // pred_fallthru
        _
      %p305 = scmp.lt.s32.totalorder %s18, 2
      // Predicated region
      $region41: #{mcvae_retina_forward.6} parent=5 // pred_check
        %p306 = pneg %p305
      $region42: #{mcvae_retina_forward.6} parent=5 // pred_check_branch
        %308 = sbr.rel (%p306) target = $region44
      $region43: #{mcvae_retina_forward.6} parent=5 // pred_region
        // Predicated region
        $region45: #{mcvae_retina_forward.6} parent=43 // pred_check
          %p309 = pneg %p38
        $region46: #{mcvae_retina_forward.6} parent=43 // pred_check_branch
          %311 = sbr.rel (%p309) target = $region48
        $region47: #{mcvae_retina_forward.6} parent=43 // pred_region
          %s312 = smul.u32 4, %s18
          %p313 = scmp.lt.s32.totalorder %s312, 7
          %s314 = scalar_select %p313, %s312, 7
          %s315 = smul.addr %s314, 4
          %s316 = scalar_lea.vmem %s0, %s315
          %s317 = smul.u32 4, %s18
        $region48: #{mcvae_retina_forward.6} parent=43 // pred_fallthru
          _
        // Predicated region
        $region49: #{mcvae_retina_forward.6} parent=43 // pred_check
          %p318 = pneg %p64
        $region50: #{mcvae_retina_forward.6} parent=43 // pred_check_branch
          %320 = sbr.rel (%p318) target = $region52
        $region51: #{mcvae_retina_forward.6} parent=43 // pred_region
          %s321 = smul.u32 64, %s18
          %p322 = scmp.lt.s32.totalorder %s321, 127
          %s323 = scalar_select %p322, %s321, 127
          %s324 = smul.addr %s323, 4
          %s325 = scalar_lea.vmem %s1, %s324
          %s326 = smul.u32 64, %s18
        $region52: #{mcvae_retina_forward.6} parent=43 // pred_fallthru
          _
      $region44: #{mcvae_retina_forward.6} parent=5 // pred_fallthru
        _
      %p327 = scmp.le.s32.totalorder 1, %s18
      %p328 = scmp.lt.s32.totalorder %s18, 3
      %p329 = pnand %p327, %p328
      %p330 = pneg %p329
      // Predicated region
      $region53: #{mcvae_retina_forward.6} parent=5 // pred_check
        _
      $region54: #{mcvae_retina_forward.6} parent=5 // pred_check_branch
        %332 = sbr.rel (%p329) target = $region56
      $region55: #{mcvae_retina_forward.6} parent=5 // pred_region
        %s333 = ssub.s32 %s18, 1
        // Predicated region
        $region57: #{mcvae_retina_forward.6} parent=55 // pred_check
          %p334 = pneg %p154
        $region58: #{mcvae_retina_forward.6} parent=55 // pred_check_branch
          %336 = sbr.rel (%p334) target = $region60
        $region59: #{mcvae_retina_forward.6} parent=55 // pred_region
          %337 = dma.done [#allocation4], 1024
        $region60: #{mcvae_retina_forward.6} parent=55 // pred_fallthru
          _
        %s338 = smul.u32 4, %s23
        %p339 = scmp.lt.s32.totalorder %s338, 7
        %s340 = scalar_select %p339, %s338, 7
        %s341 = smul.addr %s340, 4
        %s342 = scalar_lea.vmem %s0, %s341
        %p343 = pneg %p44
        %p344 = pneg %p41
        %s345 = smul.u32 64, %s23
        %p346 = scmp.lt.s32.totalorder %s345, 127
        %s347 = scalar_select %p346, %s345, 127
        %s348 = smul.addr %s347, 4
        %s349 = scalar_lea.vmem %s1, %s348
        %p350 = pneg %p70
        %p351 = pneg %p67
        %p352 = pneg %p91
        %p353 = pneg %p88
        %p354 = pneg %p112
        %p355 = pneg %p109
        %p356 = pneg %p133
        %p357 = pneg %p130
        %p358 = pneg %p154
        %p359 = pneg %p151
        %p360 = pneg %p175
        %p361 = pneg %p172
        %p362 = pneg %p196
        %p363 = pneg %p193
        %p364 = pneg %p217
        %p365 = pneg %p214
        %p366 = pneg %p238
        %p367 = pneg %p235
        %p368 = pneg %p259
        %p369 = pneg %p256
        %s370 = smul.u32 4, %s23
        %p371 = scmp.lt.s32.totalorder %s370, 7
        %s372 = scalar_select %p371, %s370, 7
        %s373 = smul.addr %s372, 4
        %s374 = scalar_lea.vmem %s0, %s373
        %s375 = smul.u32 4, %s23
        %s376 = smul.u32 64, %s23
        %p377 = scmp.lt.s32.totalorder %s376, 127
        %s378 = scalar_select %p377, %s376, 127
        %s379 = smul.addr %s378, 4
        %s380 = scalar_lea.vmem %s1, %s379
        %s381 = smul.u32 64, %s23
        %p383 = scmp.eq.s32.totalorder %s23, 0
        // Predicated region
        $region61: #{mcvae_retina_forward.6} parent=55 // pred_check
          %p384 = pneg %p383
        $region62: #{mcvae_retina_forward.6} parent=55 // pred_check_branch
          %386 = sbr.rel (%p384) target = $region64
        $region63: #{mcvae_retina_forward.6} parent=55 // pred_region
          %387 = vst [vmem:[#allocation2] sm:$0xff] 0.0
        $region64: #{mcvae_retina_forward.6} parent=55 // pred_fallthru
          _
        %v388 = vld [vmem:[#allocation2] sm:$0xff]
        %v389 = vld [vmem:[%s374] sm:$0xff]
        %v390 = vld [vmem:[%s374 + $0x8] sm:$0xff]
        %v391 = vld [vmem:[%s380] sm:$0xf]
        %v392 = vld [vmem:[%s380 + $0x4] sm:$0xf]
        %v393 = vld [vmem:[%s380 + $0x8] sm:$0xf]
        %v394 = vld [vmem:[%s380 + $0xc] sm:$0xf]
        %v395 = vld [vmem:[%s380 + $0x10] sm:$0xf]
        %v396 = vld [vmem:[%s380 + $0x14] sm:$0xf]
        %v397 = vld [vmem:[%s380 + $0x18] sm:$0xf]
        %v398 = vld [vmem:[%s380 + $0x1c] sm:$0xf]
        %v399 = vld [vmem:[%s380 + $0x20] sm:$0xf]
        %v400 = vld [vmem:[%s380 + $0x24] sm:$0xf]
        %v401 = vld [vmem:[%s380 + $0x28] sm:$0xf]
        %v402 = vld [vmem:[%s380 + $0x2c] sm:$0xf]
        %v403 = vld [vmem:[%s380 + $0x30] sm:$0xf]
        %v404 = vld [vmem:[%s380 + $0x34] sm:$0xf]
        %v405 = vld [vmem:[%s380 + $0x38] sm:$0xf]
        %v406 = vld [vmem:[%s380 + $0x3c] sm:$0xf]
        %v407 = vld [vmem:[%s380 + $0x40] sm:$0xf]
        %v408 = vld [vmem:[%s380 + $0x44] sm:$0xf]
        %v409 = vld [vmem:[%s380 + $0x48] sm:$0xf]
        %v410 = vld [vmem:[%s380 + $0x4c] sm:$0xf]
        %v411 = vld [vmem:[%s380 + $0x50] sm:$0xf]
        %v412 = vld [vmem:[%s380 + $0x54] sm:$0xf]
        %v413 = vld [vmem:[%s380 + $0x58] sm:$0xf]
        %v414 = vld [vmem:[%s380 + $0x5c] sm:$0xf]
        %v415 = vld [vmem:[%s380 + $0x60] sm:$0xf]
        %v416 = vld [vmem:[%s380 + $0x64] sm:$0xf]
        %v417 = vld [vmem:[%s380 + $0x68] sm:$0xf]
        %v418 = vld [vmem:[%s380 + $0x6c] sm:$0xf]
        %v419 = vld [vmem:[%s380 + $0x70] sm:$0xf]
        %v420 = vld [vmem:[%s380 + $0x74] sm:$0xf]
        %v421 = vld [vmem:[%s380 + $0x78] sm:$0xf]
        %v422 = vld [vmem:[%s380 + $0x7c] sm:$0xf]
        %v423 = vld [vmem:[%s380 + $0x80] sm:$0xf]
        %v424 = vld [vmem:[%s380 + $0x84] sm:$0xf]
        %v425 = vld [vmem:[%s380 + $0x88] sm:$0xf]
        %v426 = vld [vmem:[%s380 + $0x8c] sm:$0xf]
        %v427 = vld [vmem:[%s380 + $0x90] sm:$0xf]
        %v428 = vld [vmem:[%s380 + $0x94] sm:$0xf]
        %v429 = vld [vmem:[%s380 + $0x98] sm:$0xf]
        %v430 = vld [vmem:[%s380 + $0x9c] sm:$0xf]
        %v431 = vld [vmem:[%s380 + $0xa0] sm:$0xf]
        %v432 = vld [vmem:[%s380 + $0xa4] sm:$0xf]
        %v433 = vld [vmem:[%s380 + $0xa8] sm:$0xf]
        %v434 = vld [vmem:[%s380 + $0xac] sm:$0xf]
        %v435 = vld [vmem:[%s380 + $0xb0] sm:$0xf]
        %v436 = vld [vmem:[%s380 + $0xb4] sm:$0xf]
        %v437 = vld [vmem:[%s380 + $0xb8] sm:$0xf]
        %v438 = vld [vmem:[%s380 + $0xbc] sm:$0xf]
        %v439 = vld [vmem:[%s380 + $0xc0] sm:$0xf]
        %v440 = vld [vmem:[%s380 + $0xc4] sm:$0xf]
        %v441 = vld [vmem:[%s380 + $0xc8] sm:$0xf]
        %v442 = vld [vmem:[%s380 + $0xcc] sm:$0xf]
        %v443 = vld [vmem:[%s380 + $0xd0] sm:$0xf]
        %v444 = vld [vmem:[%s380 + $0xd4] sm:$0xf]
        %v445 = vld [vmem:[%s380 + $0xd8] sm:$0xf]
        %v446 = vld [vmem:[%s380 + $0xdc] sm:$0xf]
        %v447 = vld [vmem:[%s380 + $0xe0] sm:$0xf]
        %v448 = vld [vmem:[%s380 + $0xe4] sm:$0xf]
        %v449 = vld [vmem:[%s380 + $0xe8] sm:$0xf]
        %v450 = vld [vmem:[%s380 + $0xec] sm:$0xf]
        %v451 = vld [vmem:[%s380 + $0xf0] sm:$0xf]
        %v452 = vld [vmem:[%s380 + $0xf4] sm:$0xf]
        %v453 = vld [vmem:[%s380 + $0xf8] sm:$0xf]
        %v454 = vld [vmem:[%s380 + $0xfc] sm:$0xf]
        %v457 = vunpack.c.l.b16 %v389
        %v458 = vunpack.c.h.b16 %v389
        %v459 = vunpack.c.l.b16 %v390
        %v460 = vunpack.c.h.b16 %v390
        %v461 = vpack.c.b16 %v457, %v457
        %v462 = vpack.c.b16 %v458, %v458
        %v463 = vpack.c.b16 %v459, %v459
        %v464 = vpack.c.b16 %v460, %v460
        %v533 = vunpack.c.l.b16 %v391
        %v534 = vunpack.c.l.b16 %v392
        %v535 = vunpack.c.l.b16 %v393
        %v536 = vunpack.c.l.b16 %v394
        %v537 = vunpack.c.l.b16 %v395
        %v538 = vunpack.c.l.b16 %v396
        %v539 = vunpack.c.l.b16 %v397
        %v540 = vunpack.c.l.b16 %v398
        %v541 = vunpack.c.l.b16 %v399
        %v542 = vunpack.c.l.b16 %v400
        %v543 = vunpack.c.l.b16 %v401
        %v544 = vunpack.c.l.b16 %v402
        %v545 = vunpack.c.l.b16 %v403
        %v546 = vunpack.c.l.b16 %v404
        %v547 = vunpack.c.l.b16 %v405
        %v548 = vunpack.c.l.b16 %v406
        %v549 = vunpack.c.l.b16 %v407
        %v550 = vunpack.c.l.b16 %v408
        %v551 = vunpack.c.l.b16 %v409
        %v552 = vunpack.c.l.b16 %v410
        %v553 = vunpack.c.l.b16 %v411
        %v554 = vunpack.c.l.b16 %v412
        %v555 = vunpack.c.l.b16 %v413
        %v556 = vunpack.c.l.b16 %v414
        %v557 = vunpack.c.l.b16 %v415
        %v558 = vunpack.c.l.b16 %v416
        %v559 = vunpack.c.l.b16 %v417
        %v560 = vunpack.c.l.b16 %v418
        %v561 = vunpack.c.l.b16 %v419
        %v562 = vunpack.c.l.b16 %v420
        %v563 = vunpack.c.l.b16 %v421
        %v564 = vunpack.c.l.b16 %v422
        %v565 = vunpack.c.l.b16 %v423
        %v566 = vunpack.c.l.b16 %v424
        %v567 = vunpack.c.l.b16 %v425
        %v568 = vunpack.c.l.b16 %v426
        %v569 = vunpack.c.l.b16 %v427
        %v570 = vunpack.c.l.b16 %v428
        %v571 = vunpack.c.l.b16 %v429
        %v572 = vunpack.c.l.b16 %v430
        %v573 = vunpack.c.l.b16 %v431
        %v574 = vunpack.c.l.b16 %v432
        %v575 = vunpack.c.l.b16 %v433
        %v576 = vunpack.c.l.b16 %v434
        %v577 = vunpack.c.l.b16 %v435
        %v578 = vunpack.c.l.b16 %v436
        %v579 = vunpack.c.l.b16 %v437
        %v580 = vunpack.c.l.b16 %v438
        %v581 = vunpack.c.l.b16 %v439
        %v582 = vunpack.c.l.b16 %v440
        %v583 = vunpack.c.l.b16 %v441
        %v584 = vunpack.c.l.b16 %v442
        %v585 = vunpack.c.l.b16 %v443
        %v586 = vunpack.c.l.b16 %v444
        %v587 = vunpack.c.l.b16 %v445
        %v588 = vunpack.c.l.b16 %v446
        %v589 = vunpack.c.l.b16 %v447
        %v590 = vunpack.c.l.b16 %v448
        %v591 = vunpack.c.l.b16 %v449
        %v592 = vunpack.c.l.b16 %v450
        %v593 = vunpack.c.l.b16 %v451
        %v594 = vunpack.c.l.b16 %v452
        %v595 = vunpack.c.l.b16 %v453
        %v596 = vunpack.c.l.b16 %v454
        %v597 = vpack.c.b16 %v534, %v533
        %v598 = vpack.c.b16 %v536, %v535
        %v599 = vpack.c.b16 %v538, %v537
        %v600 = vpack.c.b16 %v540, %v539
        %v601 = vpack.c.b16 %v542, %v541
        %v602 = vpack.c.b16 %v544, %v543
        %v603 = vpack.c.b16 %v546, %v545
        %v604 = vpack.c.b16 %v548, %v547
        %v605 = vpack.c.b16 %v550, %v549
        %v606 = vpack.c.b16 %v552, %v551
        %v607 = vpack.c.b16 %v554, %v553
        %v608 = vpack.c.b16 %v556, %v555
        %v609 = vpack.c.b16 %v558, %v557
        %v610 = vpack.c.b16 %v560, %v559
        %v611 = vpack.c.b16 %v562, %v561
        %v612 = vpack.c.b16 %v564, %v563
        %v613 = vpack.c.b16 %v566, %v565
        %v614 = vpack.c.b16 %v568, %v567
        %v615 = vpack.c.b16 %v570, %v569
        %v616 = vpack.c.b16 %v572, %v571
        %v617 = vpack.c.b16 %v574, %v573
        %v618 = vpack.c.b16 %v576, %v575
        %v619 = vpack.c.b16 %v578, %v577
        %v620 = vpack.c.b16 %v580, %v579
        %v621 = vpack.c.b16 %v582, %v581
        %v622 = vpack.c.b16 %v584, %v583
        %v623 = vpack.c.b16 %v586, %v585
        %v624 = vpack.c.b16 %v588, %v587
        %v625 = vpack.c.b16 %v590, %v589
        %v626 = vpack.c.b16 %v592, %v591
        %v627 = vpack.c.b16 %v594, %v593
        %v628 = vpack.c.b16 %v596, %v595
        %661 = vmatprep.subr.bf16.mxu0 0
        %662 = vmatpush1.bf16.msra.mxu0 %v604
        %663 = vmatprep.subr.bf16.mxu0 0
        %664 = vmatpush1.bf16.msra.mxu0 %v603
        %665 = vmatprep.subr.bf16.mxu0 0
        %666 = vmatpush1.bf16.msra.mxu0 %v602
        %667 = vmatprep.subr.bf16.mxu0 0
        %668 = vmatpush1.bf16.msra.mxu0 %v601
        %669 = vmatprep.subr.bf16.mxu0 0
        %670 = vmatpush1.bf16.msra.mxu0 %v600
        %671 = vmatprep.subr.bf16.mxu0 0
        %672 = vmatpush1.bf16.msra.mxu0 %v599
        %673 = vmatprep.subr.bf16.mxu0 0
        %674 = vmatpush1.bf16.msra.mxu0 %v598
        %675 = vmatprep.subr.bf16.mxu0 0
        %676 = vmatpush1.bf16.msra.mxu0 %v597
        %677 = vmatprep.subr.bf16.mxu0 0
        %678 = vmatpush2.bf16.msra.mxu0 %v612
        %679 = vmatprep.subr.bf16.mxu0 0
        %680 = vmatpush2.bf16.msra.mxu0 %v611
        %681 = vmatprep.subr.bf16.mxu0 0
        %682 = vmatpush2.bf16.msra.mxu0 %v610
        %683 = vmatprep.subr.bf16.mxu0 0
        %684 = vmatpush2.bf16.msra.mxu0 %v609
        %685 = vmatprep.subr.bf16.mxu0 0
        %686 = vmatpush2.bf16.msra.mxu0 %v608
        %687 = vmatprep.subr.bf16.mxu0 0
        %688 = vmatpush2.bf16.msra.mxu0 %v607
        %689 = vmatprep.subr.bf16.mxu0 0
        %690 = vmatpush2.bf16.msra.mxu0 %v606
        %691 = vmatprep.subr.bf16.mxu0 0
        %692 = vmatpush2.bf16.msra.mxu0 %v605
        %693 = vmatprep.mubr.bf16.mxu0 %v462
        %694 = vmatmul.mubr.bf16.gmra.mxu0 %v461
        %v695 = vpop.f32.mrf.mxu0
        %v696 = vadd.f32 0.0, %v695
        %v697 = vpop.f32.mrf.mxu0
        %v698 = vpop.f32.mrf.mxu0
        %v699 = vpop.f32.mrf.mxu0
        %700 = vdwg.mxu0
        %701 = vmatprep.subr.bf16.mxu0 0
        %702 = vmatpush1.bf16.msra.mxu0 %v620
        %703 = vmatprep.subr.bf16.mxu0 0
        %704 = vmatpush1.bf16.msra.mxu0 %v619
        %705 = vmatprep.subr.bf16.mxu0 0
        %706 = vmatpush1.bf16.msra.mxu0 %v618
        %707 = vmatprep.subr.bf16.mxu0 0
        %708 = vmatpush1.bf16.msra.mxu0 %v617
        %709 = vmatprep.subr.bf16.mxu0 0
        %710 = vmatpush1.bf16.msra.mxu0 %v616
        %711 = vmatprep.subr.bf16.mxu0 0
        %712 = vmatpush1.bf16.msra.mxu0 %v615
        %713 = vmatprep.subr.bf16.mxu0 0
        %714 = vmatpush1.bf16.msra.mxu0 %v614
        %715 = vmatprep.subr.bf16.mxu0 0
        %716 = vmatpush1.bf16.msra.mxu0 %v613
        %717 = vmatprep.subr.bf16.mxu0 0
        %718 = vmatpush2.bf16.msra.mxu0 %v628
        %719 = vmatprep.subr.bf16.mxu0 0
        %720 = vmatpush2.bf16.msra.mxu0 %v627
        %721 = vmatprep.subr.bf16.mxu0 0
        %722 = vmatpush2.bf16.msra.mxu0 %v626
        %723 = vmatprep.subr.bf16.mxu0 0
        %724 = vmatpush2.bf16.msra.mxu0 %v625
        %725 = vmatprep.subr.bf16.mxu0 0
        %726 = vmatpush2.bf16.msra.mxu0 %v624
        %727 = vmatprep.subr.bf16.mxu0 0
        %728 = vmatpush2.bf16.msra.mxu0 %v623
        %729 = vmatprep.subr.bf16.mxu0 0
        %730 = vmatpush2.bf16.msra.mxu0 %v622
        %731 = vmatprep.subr.bf16.mxu0 0
        %732 = vmatpush2.bf16.msra.mxu0 %v621
        %733 = vmatprep.mubr.bf16.mxu0 %v464
        %734 = vmatmul.mubr.bf16.gmra.mxu0 %v463
        %v735 = vpop.f32.mrf.mxu0
        %v736 = vadd.f32 %v696, %v735
        %v737 = vpop.f32.mrf.mxu0
        %v738 = vpop.f32.mrf.mxu0
        %v739 = vpop.f32.mrf.mxu0
        %740 = vdwg.mxu0
        %v741 = vadd.f32 %v388, %v736
        %742 = vst [vmem:[#allocation2] sm:$0xff] %v741
        %p743 = scmp.eq.s32.totalorder %s23, 1
        // Predicated region
        $region65: #{mcvae_retina_forward.6} parent=55 // pred_check
          %p744 = pneg %p743
        $region66: #{mcvae_retina_forward.6} parent=55 // pred_check_branch
          %746 = sbr.rel (%p744) target = $region68
        $region67: #{mcvae_retina_forward.6} parent=55 // pred_region
          %v747 = vld [vmem:[#allocation2] sm:$0xff]
          %v748 = vld [vmem:[%s2] sm:$0x1]
          %v750 = vlaneseq
          %v751 = vshrl.u32 %v750, 7
          %v752 = vsub.s32 0, %v751
          %v753 = vrot.slane %v748, %v752
          %v755 = vadd.f32 %v747, %v753
          %v756 = vmax.f32 %v755, 0.0
          %v757 = vpack.c.bf16 %v756, %v756
          %v758 = vld [vmem:[%s3] sm:$0xff]
          %v759 = vld [vmem:[%s3 + $0x8] sm:$0xff]
          %v760 = vld [vmem:[%s3 + $0x10] sm:$0xff]
          %v761 = vld [vmem:[%s3 + $0x18] sm:$0xff]
          %v762 = vld [vmem:[%s3 + $0x20] sm:$0xff]
          %v763 = vld [vmem:[%s3 + $0x28] sm:$0xff]
          %v764 = vld [vmem:[%s3 + $0x30] sm:$0xff]
          %v765 = vld [vmem:[%s3 + $0x38] sm:$0xff]
          %v766 = vld [vmem:[%s3 + $0x40] sm:$0xff]
          %v767 = vld [vmem:[%s3 + $0x48] sm:$0xff]
          %v768 = vld [vmem:[%s3 + $0x50] sm:$0xff]
          %v769 = vld [vmem:[%s3 + $0x58] sm:$0xff]
          %v770 = vld [vmem:[%s3 + $0x60] sm:$0xff]
          %v771 = vld [vmem:[%s3 + $0x68] sm:$0xff]
          %v772 = vld [vmem:[%s3 + $0x70] sm:$0xff]
          %v773 = vld [vmem:[%s3 + $0x78] sm:$0xff]
          %v774 = vld [vmem:[%s4] sm:$0x3]
          %v776 = vlaneseq
          %v777 = vshrl.u32 %v776, 7
          %v778 = vsub.s32 0, %v777
          %v779 = vrot.slane %v774, %v778
          %v780 = vlaneseq
          %v781 = vshrl.u32 %v780, 7
          %v782 = vsub.s32 1, %v781
          %v783 = vrot.slane %v774, %v782
          %v802 = vunpack.c.l.b16 %v758
          %v803 = vunpack.c.h.b16 %v758
          %v804 = vunpack.c.l.b16 %v759
          %v805 = vunpack.c.h.b16 %v759
          %v806 = vunpack.c.l.b16 %v760
          %v807 = vunpack.c.h.b16 %v760
          %v808 = vunpack.c.l.b16 %v761
          %v809 = vunpack.c.h.b16 %v761
          %v810 = vunpack.c.l.b16 %v762
          %v811 = vunpack.c.h.b16 %v762
          %v812 = vunpack.c.l.b16 %v763
          %v813 = vunpack.c.h.b16 %v763
          %v814 = vunpack.c.l.b16 %v764
          %v815 = vunpack.c.h.b16 %v764
          %v816 = vunpack.c.l.b16 %v765
          %v817 = vunpack.c.h.b16 %v765
          %v818 = vunpack.c.l.b16 %v766
          %v819 = vunpack.c.h.b16 %v766
          %v820 = vunpack.c.l.b16 %v767
          %v821 = vunpack.c.h.b16 %v767
          %v822 = vunpack.c.l.b16 %v768
          %v823 = vunpack.c.h.b16 %v768
          %v824 = vunpack.c.l.b16 %v769
          %v825 = vunpack.c.h.b16 %v769
          %v826 = vunpack.c.l.b16 %v770
          %v827 = vunpack.c.h.b16 %v770
          %v828 = vunpack.c.l.b16 %v771
          %v829 = vunpack.c.h.b16 %v771
          %v830 = vunpack.c.l.b16 %v772
          %v831 = vunpack.c.h.b16 %v772
          %v832 = vunpack.c.l.b16 %v773
          %v833 = vunpack.c.h.b16 %v773
          %v834 = vpack.c.b16 %v804, %v802
          %v835 = vpack.c.b16 %v805, %v803
          %v836 = vpack.c.b16 %v808, %v806
          %v837 = vpack.c.b16 %v809, %v807
          %v838 = vpack.c.b16 %v812, %v810
          %v839 = vpack.c.b16 %v813, %v811
          %v840 = vpack.c.b16 %v816, %v814
          %v841 = vpack.c.b16 %v817, %v815
          %v842 = vpack.c.b16 %v820, %v818
          %v843 = vpack.c.b16 %v821, %v819
          %v844 = vpack.c.b16 %v824, %v822
          %v845 = vpack.c.b16 %v825, %v823
          %v846 = vpack.c.b16 %v828, %v826
          %v847 = vpack.c.b16 %v829, %v827
          %v848 = vpack.c.b16 %v832, %v830
          %v849 = vpack.c.b16 %v833, %v831
          %866 = vmatprep.subr.bf16.mxu0 %v849
          %867 = vmatpush1.bf16.msra.mxu0 %v848
          %868 = vmatprep.subr.bf16.mxu0 %v847
          %869 = vmatpush1.bf16.msra.mxu0 %v846
          %870 = vmatprep.subr.bf16.mxu0 %v845
          %871 = vmatpush1.bf16.msra.mxu0 %v844
          %872 = vmatprep.subr.bf16.mxu0 %v843
          %873 = vmatpush1.bf16.msra.mxu0 %v842
          %874 = vmatprep.subr.bf16.mxu0 %v841
          %875 = vmatpush1.bf16.msra.mxu0 %v840
          %876 = vmatprep.subr.bf16.mxu0 %v839
          %877 = vmatpush1.bf16.msra.mxu0 %v838
          %878 = vmatprep.subr.bf16.mxu0 %v837
          %879 = vmatpush1.bf16.msra.mxu0 %v836
          %880 = vmatprep.subr.bf16.mxu0 %v835
          %881 = vmatpush1.bf16.msra.mxu0 %v834
          %882 = vmatprep.subr.bf16.mxu0 0
          %883 = vmatpush2.bf16.msra.mxu0 0
          %884 = vmatprep.subr.bf16.mxu0 0
          %885 = vmatpush2.bf16.msra.mxu0 0
          %886 = vmatprep.subr.bf16.mxu0 0
          %887 = vmatpush2.bf16.msra.mxu0 0
          %888 = vmatprep.subr.bf16.mxu0 0
          %889 = vmatpush2.bf16.msra.mxu0 0
          %890 = vmatprep.subr.bf16.mxu0 0
          %891 = vmatpush2.bf16.msra.mxu0 0
          %892 = vmatprep.subr.bf16.mxu0 0
          %893 = vmatpush2.bf16.msra.mxu0 0
          %894 = vmatprep.subr.bf16.mxu0 0
          %895 = vmatpush2.bf16.msra.mxu0 0
          %896 = vmatprep.subr.bf16.mxu0 0
          %897 = vmatpush2.bf16.msra.mxu0 0
          %898 = vmatprep.mubr.bf16.mxu0 0
          %899 = vmatmul.mubr.bf16.gmra.mxu0 %v757
          %v900 = vpop.f32.mrf.mxu0
          %v901 = vadd.f32 %v779, %v900
          %v902 = vpop.f32.mrf.mxu0
          %v903 = vadd.f32 %v783, %v902
          %v904 = vpop.f32.mrf.mxu0
          %v905 = vpop.f32.mrf.mxu0
          %906 = vdwg.mxu0
          %v907 = vmul.f32 %v903, 0.5
          %v908 = vmul.f32 %v907, 1.442695
          %v909 = vpow.pop %v908
          %v910 = vld [vmem:[%s7] sm:$0xff]
          %v911 = vmul.f32 %v910, %v909
          %v912 = vadd.f32 %v901, %v911
          %v913 = vld [vmem:[%s8] sm:$0xff]
          %v914 = vmul.f32 %v913, %v909
          %v915 = vadd.f32 %v901, %v914
          %v916 = vpack.c.bf16 %v915, %v915
          %v917 = vld [vmem:[#allocation3] sm:$0xf]
          %v918 = vld [vmem:[#allocation3 + $0x4] sm:$0xf]
          %v919 = vld [vmem:[#allocation3 + $0x8] sm:$0xf]
          %v920 = vld [vmem:[#allocation3 + $0xc] sm:$0xf]
          %v921 = vld [vmem:[#allocation3 + $0x10] sm:$0xf]
          %v922 = vld [vmem:[#allocation3 + $0x14] sm:$0xf]
          %v923 = vld [vmem:[#allocation3 + $0x18] sm:$0xf]
          %v924 = vld [vmem:[#allocation3 + $0x1c] sm:$0xf]
          %v925 = vld [vmem:[#allocation3 + $0x20] sm:$0xf]
          %v926 = vld [vmem:[#allocation3 + $0x24] sm:$0xf]
          %v927 = vld [vmem:[#allocation3 + $0x28] sm:$0xf]
          %v928 = vld [vmem:[#allocation3 + $0x2c] sm:$0xf]
          %v929 = vld [vmem:[#allocation3 + $0x30] sm:$0xf]
          %v930 = vld [vmem:[#allocation3 + $0x34] sm:$0xf]
          %v931 = vld [vmem:[#allocation3 + $0x38] sm:$0xf]
          %v932 = vld [vmem:[#allocation3 + $0x3c] sm:$0xf]
          %v933 = vld [vmem:[%s6] sm:$0x1]
          %v935 = vlaneseq
          %v936 = vshrl.u32 %v935, 7
          %v937 = vsub.s32 0, %v936
          %v938 = vrot.slane %v933, %v937
          %v956 = vunpack.c.l.b16 %v917
          %v957 = vunpack.c.l.b16 %v918
          %v958 = vunpack.c.l.b16 %v919
          %v959 = vunpack.c.l.b16 %v920
          %v960 = vunpack.c.l.b16 %v921
          %v961 = vunpack.c.l.b16 %v922
          %v962 = vunpack.c.l.b16 %v923
          %v963 = vunpack.c.l.b16 %v924
          %v964 = vunpack.c.l.b16 %v925
          %v965 = vunpack.c.l.b16 %v926
          %v966 = vunpack.c.l.b16 %v927
          %v967 = vunpack.c.l.b16 %v928
          %v968 = vunpack.c.l.b16 %v929
          %v969 = vunpack.c.l.b16 %v930
          %v970 = vunpack.c.l.b16 %v931
          %v971 = vunpack.c.l.b16 %v932
          %v972 = vpack.c.b16 %v957, %v956
          %v973 = vpack.c.b16 %v959, %v958
          %v974 = vpack.c.b16 %v961, %v960
          %v975 = vpack.c.b16 %v963, %v962
          %v976 = vpack.c.b16 %v965, %v964
          %v977 = vpack.c.b16 %v967, %v966
          %v978 = vpack.c.b16 %v969, %v968
          %v979 = vpack.c.b16 %v971, %v970
          %988 = vmatprep.subr.bf16.mxu0 0
          %989 = vmatpush1.bf16.msra.mxu0 %v979
          %990 = vmatprep.subr.bf16.mxu0 0
          %991 = vmatpush1.bf16.msra.mxu0 %v978
          %992 = vmatprep.subr.bf16.mxu0 0
          %993 = vmatpush1.bf16.msra.mxu0 %v977
          %994 = vmatprep.subr.bf16.mxu0 0
          %995 = vmatpush1.bf16.msra.mxu0 %v976
          %996 = vmatprep.subr.bf16.mxu0 0
          %997 = vmatpush1.bf16.msra.mxu0 %v975
          %998 = vmatprep.subr.bf16.mxu0 0
          %999 = vmatpush1.bf16.msra.mxu0 %v974
          %1000 = vmatprep.subr.bf16.mxu0 0
          %1001 = vmatpush1.bf16.msra.mxu0 %v973
          %1002 = vmatprep.subr.bf16.mxu0 0
          %1003 = vmatpush1.bf16.msra.mxu0 %v972
          %1004 = vmatprep.subr.bf16.mxu0 0
          %1005 = vmatpush2.bf16.msra.mxu0 0
          %1006 = vmatprep.subr.bf16.mxu0 0
          %1007 = vmatpush2.bf16.msra.mxu0 0
          %1008 = vmatprep.subr.bf16.mxu0 0
          %1009 = vmatpush2.bf16.msra.mxu0 0
          %1010 = vmatprep.subr.bf16.mxu0 0
          %1011 = vmatpush2.bf16.msra.mxu0 0
          %1012 = vmatprep.subr.bf16.mxu0 0
          %1013 = vmatpush2.bf16.msra.mxu0 0
          %1014 = vmatprep.subr.bf16.mxu0 0
          %1015 = vmatpush2.bf16.msra.mxu0 0
          %1016 = vmatprep.subr.bf16.mxu0 0
          %1017 = vmatpush2.bf16.msra.mxu0 0
          %1018 = vmatprep.subr.bf16.mxu0 0
          %1019 = vmatpush2.bf16.msra.mxu0 0
          %1020 = vmatprep.mubr.bf16.mxu0 0
          %1021 = vmatmul.mubr.bf16.gmra.mxu0 %v916
          %v1022 = vpop.f32.mrf.mxu0
          %v1023 = vadd.f32 %v938, %v1022
          %v1024 = vpop.f32.mrf.mxu0
          %v1025 = vpop.f32.mrf.mxu0
          %v1026 = vpop.f32.mrf.mxu0
          %1027 = vdwg.mxu0
          %v1028 = vmax.f32 %v1023, 0.0
          %1029 = vst [vmem:[%s9] sm:$0xff] %v912
          %1030 = vst [vmem:[%s9 + $0x8] sm:$0xff] %v901
          %1031 = vst [vmem:[%s9 + $0x10] sm:$0xff] %v903
          %v1032 = vpack.c.bf16 %v1028, %v1028
          %1033 = vst [vmem:[%s10] sm:$0xf] %v1032
        $region68: #{mcvae_retina_forward.6} parent=55 // pred_fallthru
          _
        // Predicated region
        $region69: #{mcvae_retina_forward.6} parent=55 // pred_check
          %p1034 = pneg %p235
        $region70: #{mcvae_retina_forward.6} parent=55 // pred_check_branch
          %1036 = sbr.rel (%p1034) target = $region72
        $region71: #{mcvae_retina_forward.6} parent=55 // pred_region
          _
        $region72: #{mcvae_retina_forward.6} parent=55 // pred_fallthru
          _
        // Predicated region
        $region73: #{mcvae_retina_forward.6} parent=55 // pred_check
          %p1037 = pneg %p256
        $region74: #{mcvae_retina_forward.6} parent=55 // pred_check_branch
          %1039 = sbr.rel (%p1037) target = $region76
        $region75: #{mcvae_retina_forward.6} parent=55 // pred_region
          _
        $region76: #{mcvae_retina_forward.6} parent=55 // pred_fallthru
          _
        // Predicated region
        $region77: #{mcvae_retina_forward.6} parent=55 // pred_check
          %p1040 = pneg %p235
        $region78: #{mcvae_retina_forward.6} parent=55 // pred_check_branch
          %1042 = sbr.rel (%p1040) target = $region80
        $region79: #{mcvae_retina_forward.6} parent=55 // pred_region
          _
        $region80: #{mcvae_retina_forward.6} parent=55 // pred_fallthru
          _
        // Predicated region
        $region81: #{mcvae_retina_forward.6} parent=55 // pred_check
          %p1043 = pneg %p256
        $region82: #{mcvae_retina_forward.6} parent=55 // pred_check_branch
          %1045 = sbr.rel (%p1043) target = $region84
        $region83: #{mcvae_retina_forward.6} parent=55 // pred_region
          _
        $region84: #{mcvae_retina_forward.6} parent=55 // pred_fallthru
          _
      $region56: #{mcvae_retina_forward.6} parent=5 // pred_fallthru
        _
      %p1046 = scmp.le.s32.totalorder 2, %s18
      // Predicated region
      $region85: #{mcvae_retina_forward.6} parent=5 // pred_check
        %p1047 = pneg %p1046
      $region86: #{mcvae_retina_forward.6} parent=5 // pred_check_branch
        %1049 = sbr.rel (%p1047) target = $region88
      $region87: #{mcvae_retina_forward.6} parent=5 // pred_region
        %s1050 = ssub.s32 %s18, 2
      $region88: #{mcvae_retina_forward.6} parent=5 // pred_fallthru
        _
    $region6: #{mcvae_retina_forward.6} parent=1 // loop_footer
      %s22 = sadd.s32 1, %s18
    $region7: #{mcvae_retina_forward.6} parent=1 // loop_footer_branch
      %17 = sbr.rel target = $region3
    $region8: #{mcvae_retina_forward.6} parent=1 // loop_exit
      _
    %1051 = vsyncpa [#allocation4], 1
    %s1052 = scalar_lea.sflag [#allocation4], 1
    %1053 = vsyncpa %s1052, 1

</llo_original>
